<compile_context>
chip_gen: v7x
topology: tpu7x:2x2x1
jax: 0.10.0
libtpu: 0.0.40
codegen_flags: <defaults>
</compile_context>

<pallas_src>
import functools
import math

import jax
import jax.numpy as jnp
from jax import lax
from jax.experimental import pallas as pl
from jax.experimental.pallas import tpu as pltpu


# --------------------------- conv-as-matmul kernel --------------------------- #

def _matmul_bias_kernel(a_ref, w_ref, b_ref, o_ref, *, relu, w_scale):
    """(tm,K) @ (K,N) + (1,N), optional weight scaling and ReLU, f32 MXU accum."""
    w = w_ref[...]
    if w_scale != 1.0:
        w = w * w_scale                 # scale the small (K,N) operand, not the patches
    acc = jnp.dot(a_ref[...], w, preferred_element_type=jnp.float32)
    acc = acc + b_ref[...]              # (1,N) broadcasts over rows
    if relu:
        acc = jnp.maximum(acc, 0.0)
    o_ref[...] = acc.astype(o_ref.dtype)


def pallas_matmul_bias(a, w, b, *, relu=False, w_scale=1.0, block_m=512):
    """a:(M,K) @ w:(K,N) + b:(N,), fused bias/ReLU, M-tiled over a parallel grid."""
    M, K = a.shape
    K2, N = w.shape
    assert K == K2, (K, K2)
    tm = M if M <= block_m else block_m          # block_m is a multiple of 8
    grid_m = pl.cdiv(M, tm)
    kernel = functools.partial(_matmul_bias_kernel, relu=relu, w_scale=w_scale)
    cost = pl.CostEstimate(flops=2 * M * K * N, transcendentals=0,
                           bytes_accessed=4 * (M * K + K * N + N + M * N))
    return pl.pallas_call(
        kernel,
        out_shape=jax.ShapeDtypeStruct((M, N), jnp.float32),
        grid=(grid_m,),
        in_specs=[
            pl.BlockSpec((tm, K), lambda i: (i, 0)),
            pl.BlockSpec((K, N), lambda i: (0, 0)),
            pl.BlockSpec((1, N), lambda i: (0, 0)),
        ],
        out_specs=pl.BlockSpec((tm, N), lambda i: (i, 0)),
        compiler_params=pltpu.CompilerParams(dimension_semantics=("parallel",)),
        cost_estimate=cost,
    )(a.astype(jnp.float32), w.astype(jnp.float32),
      b.reshape(1, N).astype(jnp.float32))


def conv2d_nhwc(x, wmat, b, *, k, stride, relu=True, w_scale=1.0):
    """PyTorch Conv2d (valid padding, given stride) on NHWC activations.

    wmat is the PyTorch weight (Co,Ci,k,k) reshaped to (Ci*k*k, Co); its row
    order (ci,kh,kw) matches conv_general_dilated_patches' feature ordering.
    """
    # TODO(synk): pull the patch extraction inside the Pallas kernel body
    # (strided reads from a VMEM-resident NHWC block) to drop this XLA op too.
    n = x.shape[0]
    patches = lax.conv_general_dilated_patches(
        x, filter_shape=(k, k), window_strides=(stride, stride), padding="VALID",
        dimension_numbers=("NHWC", "HWIO", "NHWC"))
    _, ho, wo, kp = patches.shape                       # kp == Ci*k*k
    out = pallas_matmul_bias(patches.reshape(n * ho * wo, kp), wmat, b,
                             relu=relu, w_scale=w_scale)
    return out.reshape(n, ho, wo, -1)                   # stay NHWC


# ------------------------ fused noisy dueling head --------------------------- #

def _dueling_head_kernel(flat_ref, w1_ref, b1_ref, w2_ref, b2_ref, q_ref,
                         *, n_actions):
    """ReLU(x@W1+b1) -> @W2+b2 -> dueling combine, all in one VMEM-resident pass.

    W1 = [adv1.W_eff^T | val1.W_eff^T]            (F, 2H)
    W2 = [[adv2.W_eff^T, 0], [0, val2.W_eff^T]]   (2H, NPAD), zero-padded lanes
    (noisy epsilon already folded into W/b before the call; sigma is zero in
     the structural-zero / padding blocks so they stay exactly zero.)
    """
    h = jnp.dot(flat_ref[...], w1_ref[...],
                preferred_element_type=jnp.float32) + b1_ref[...]
    h = jnp.maximum(h, 0.0)                              # (tb, 2H) = [h_adv | h_val]
    o2 = jnp.dot(h, w2_ref[...],
                 preferred_element_type=jnp.float32) + b2_ref[...]   # (tb, NPAD)
    adv = o2[:, :n_actions]                              # (tb, A)
    val = o2[:, n_actions:n_actions + 1]                 # (tb, 1)
    q = val + (adv - jnp.mean(adv, axis=1, keepdims=True))
    q_ref[...] = q.astype(q_ref.dtype)


def fused_dueling_head(flat, w1, b1, w2, b2, *, n_actions, block_b=512):
    B, F = flat.shape
    tb = B if B <= block_b else block_b
    grid_b = pl.cdiv(B, tb)
    h2, npad = w1.shape[1], w2.shape[1]
    kernel = functools.partial(_dueling_head_kernel, n_actions=n_actions)
    cost = pl.CostEstimate(
        flops=2 * B * (F * h2 + h2 * npad), transcendentals=0,
        bytes_accessed=4 * (B * F + w1.size + b1.size + w2.size + b2.size
                            + B * n_actions))
    const = lambda shape: pl.BlockSpec(shape, lambda i: (0, 0))
    return pl.pallas_call(
        kernel,
        out_shape=jax.ShapeDtypeStruct((B, n_actions), jnp.float32),
        grid=(grid_b,),
        in_specs=[
            pl.BlockSpec((tb, F), lambda i: (i, 0)),
            const(w1.shape), const(b1.shape), const(w2.shape), const(b2.shape),
        ],
        out_specs=pl.BlockSpec((tb, n_actions), lambda i: (i, 0)),
        compiler_params=pltpu.CompilerParams(dimension_semantics=("parallel",)),
        cost_estimate=cost,
    )(flat, w1, b1, w2, b2)


# --------------------------- parameter construction ------------------------- #

SIGMA_INIT = 0.017


def init_conv(key, c_out, c_in, k):
    kw, kb = jax.random.split(key)
    bound = 1.0 / math.sqrt(c_in * k * k)            # PyTorch Conv2d default init
    return {"w": jax.random.uniform(kw, (c_out, c_in, k, k), jnp.float32, -bound, bound),
            "b": jax.random.uniform(kb, (c_out,), jnp.float32, -bound, bound)}


def init_noisy_linear(key, in_f, out_f):
    kw, kb = jax.random.split(key)
    std = math.sqrt(3.0 / in_f)                      # NoisyLinear.reset_parameters
    return {"w": jax.random.uniform(kw, (out_f, in_f), jnp.float32, -std, std),
            "b": jax.random.uniform(kb, (out_f,), jnp.float32, -std, std),
            "sigma_w": jnp.full((out_f, in_f), SIGMA_INIT, jnp.float32),
            "sigma_b": jnp.full((out_f,), SIGMA_INIT, jnp.float32)}


def init_params(key, f_shape, n_actions, conv_out_dim):
    ks = jax.random.split(key, 7)
    return {"c1": init_conv(ks[0], 32, f_shape[0], 8),
            "c2": init_conv(ks[1], 64, 32, 4),
            "c3": init_conv(ks[2], 64, 64, 3),
            "adv1": init_noisy_linear(ks[3], conv_out_dim, 256),
            "adv2": init_noisy_linear(ks[4], 256, n_actions),
            "val1": init_noisy_linear(ks[5], conv_out_dim, 256),
            "val2": init_noisy_linear(ks[6], 256, 1)}


def prepare_params(p, n_actions):
    """One-time repack of PyTorch-layout params into the TPU kernel layout."""
    def conv_prep(c):
        co = c["w"].shape[0]
        # (Co,Ci,k,k) -> (Ci*k*k, Co); row order (ci,kh,kw) matches patches.
        return {"wmat": c["w"].reshape(co, -1).T, "b": c["b"]}

    hid = p["adv1"]["w"].shape[0]                    # 256
    A = n_actions
    npad = max(128, ((A + 1 + 127) // 128) * 128)    # lane-dense second matmul

    w1 = jnp.concatenate([p["adv1"]["w"].T, p["val1"]["w"].T], axis=1)
    s1 = jnp.concatenate([p["adv1"]["sigma_w"].T, p["val1"]["sigma_w"].T], axis=1)
    b1 = jnp.concatenate([p["adv1"]["b"], p["val1"]["b"]]).reshape(1, 2 * hid)
    sb1 = jnp.concatenate([p["adv1"]["sigma_b"], p["val1"]["sigma_b"]]).reshape(1, 2 * hid)

    # Block-diagonal second layer: columns [0:A] = adv2, column A = val2,
    # columns A+1.. are zero padding (sigma zero there -> stays exactly zero).
    w2 = (jnp.zeros((2 * hid, npad), jnp.float32)
          .at[:hid, :A].set(p["adv2"]["w"].T)
          .at[hid:, A].set(p["val2"]["w"][0]))
    s2 = (jnp.zeros((2 * hid, npad), jnp.float32)
          .at[:hid, :A].set(p["adv2"]["sigma_w"].T)
          .at[hid:, A].set(p["val2"]["sigma_w"][0]))
    b2 = (jnp.zeros((npad,), jnp.float32)
          .at[:A].set(p["adv2"]["b"]).at[A].set(p["val2"]["b"][0])).reshape(1, npad)
    sb2 = (jnp.zeros((npad,), jnp.float32)
           .at[:A].set(p["adv2"]["sigma_b"]).at[A].set(p["val2"]["sigma_b"][0])).reshape(1, npad)

    return {"c1": conv_prep(p["c1"]), "c2": conv_prep(p["c2"]), "c3": conv_prep(p["c3"]),
            "head": {"w1": w1, "s1": s1, "b1": b1, "sb1": sb1,
                     "w2": w2, "s2": s2, "b2": b2, "sb2": sb2}}


def sample_noisy_head(head, key):
    """NoisyLinear: w_eff = w + sigma * eps, eps ~ N(0,1) drawn fresh per forward.

    Drawn with jax.random so it lowers on every backend (the on-chip hardware
    PRNG has no interpret lowering); the eps tensors are tiny (~0.4 MB total)
    and the fused add is XLA-fused with the RNG, so this is not on the hot path.
    """
    k1, k2, k3, k4 = jax.random.split(key, 4)
    w1 = head["w1"] + head["s1"] * jax.random.normal(k1, head["w1"].shape, jnp.float32)
    b1 = head["b1"] + head["sb1"] * jax.random.normal(k2, head["b1"].shape, jnp.float32)
    w2 = head["w2"] + head["s2"] * jax.random.normal(k3, head["w2"].shape, jnp.float32)
    b2 = head["b2"] + head["sb2"] * jax.random.normal(k4, head["b2"].shape, jnp.float32)
    return w1, b1, w2, b2


# ------------------------------ forward pass -------------------------------- #

@functools.partial(jax.jit, static_argnames=("n_actions",))
def duel_noisy_dqn_forward(params, x, noise_key, *, n_actions):
    # x: (N, C, H, W) raw frames; x.float()/256 is folded into the conv1 weight
    # scale inside its kernel.  Activations stay NHWC between conv layers.
    xh = jnp.transpose(x.astype(jnp.float32), (0, 2, 3, 1))        # NCHW -> NHWC once
    h = conv2d_nhwc(xh, params["c1"]["wmat"], params["c1"]["b"],
                    k=8, stride=4, relu=True, w_scale=1.0 / 256.0)
    h = conv2d_nhwc(h, params["c2"]["wmat"], params["c2"]["b"], k=4, stride=2, relu=True)
    h = conv2d_nhwc(h, params["c3"]["wmat"], params["c3"]["b"], k=3, stride=1, relu=True)
    # nn.Flatten on NCHW: enforce the (C,H,W) order once, at the flatten point.
    flat = jnp.transpose(h, (0, 3, 1, 2)).reshape(h.shape[0], -1)
    w1, b1, w2, b2 = sample_noisy_head(params["head"], noise_key)
    return fused_dueling_head(flat, w1, b1, w2, b2, n_actions=n_actions)


# ---------------------------------- main ------------------------------------ #

if __name__ == "__main__":
    # 4 stacked frames at 36x36 (conv stack: 36 -> 8 -> 3 -> 1, so the flatten
    # width is 64*1*1 = 64); Atari Bowling action space.
    batch = 2
    f_shape = (4, 36, 36)
    n_actions = 6

    root = jax.random.PRNGKey(0)
    k_param, k_input, k_noise = jax.random.split(root, 3)

    conv_out_dim = 64 * 1 * 1
    raw_params = init_params(k_param, f_shape, n_actions, conv_out_dim)
    params = prepare_params(raw_params, n_actions)

    # Raw-frame-like input in [0, 255); the /256 happens inside the conv1 kernel.
    x = jax.random.uniform(k_input, (batch,) + f_shape, jnp.float32, 0.0, 255.0)

    q = duel_noisy_dqn_forward(params, x, k_noise, n_actions=n_actions)
    q = jax.block_until_ready(q)
    assert q.shape == (batch, n_actions) and q.dtype == jnp.float32
    assert bool(jnp.all(jnp.isfinite(q)))
    print("KERNEL_OK")
</pallas_src>

<mosaic_0001>
module attributes {stable_mosaic.version = 11 : i64} {
  func.func @_matmul_bias_kernel(%arg0: i32, %arg1: memref<128x256xf32, #tpu.memory_space<vmem>>, %arg2: memref<256x32xf32, #tpu.memory_space<vmem>>, %arg3: memref<1x32xf32, #tpu.memory_space<vmem>>, %arg4: memref<128x32xf32, #tpu.memory_space<vmem>>) attributes {dimension_semantics = [#tpu.dimension_semantics<parallel>], iteration_bounds = array<i64: 1>, scalar_prefetch = 0 : i64, scratch_operands = 0 : i64, tpu.core_type = #tpu.core_type<tc>, window_params = [{transform_indices = @transform_0, window_bounds = array<i64: 128, 256>}, {pipeline_mode = #tpu.pipeline_mode<synchronous>, transform_indices = @transform_1, window_bounds = array<i64: 256, 32>}, {pipeline_mode = #tpu.pipeline_mode<synchronous>, transform_indices = @transform_2, window_bounds = array<i64: 1, 32>}, {transform_indices = @transform_3, window_bounds = array<i64: 128, 32>}]} {
    %c0 = arith.constant 0 : index
    %c0_0 = arith.constant 0 : index
    %0 = vector.load %arg2[%c0, %c0_0] : memref<256x32xf32, #tpu.memory_space<vmem>>, vector<256x32xf32>
    %cst = arith.constant 3.906250e-03 : f32
    %1 = vector.broadcast %cst : f32 to vector<256x32xf32>
    %2 = arith.mulf %0, %1 : vector<256x32xf32>
    %c0_1 = arith.constant 0 : index
    %c0_2 = arith.constant 0 : index
    %3 = vector.load %arg1[%c0_1, %c0_2] : memref<128x256xf32, #tpu.memory_space<vmem>>, vector<128x256xf32>
    %cst_3 = arith.constant dense<0.000000e+00> : vector<128x32xf32>
    %4 = tpu.matmul %3, %2, %cst_3 {dimension_numbers = #tpu.dot_dimension_numbers<[1], [0], [0], [1], [0, 0, 1, 1], [], []>} : vector<128x256xf32>, vector<256x32xf32>, vector<128x32xf32> -> vector<128x32xf32>
    %c0_4 = arith.constant 0 : index
    %c0_5 = arith.constant 0 : index
    %5 = vector.load %arg3[%c0_4, %c0_5] : memref<1x32xf32, #tpu.memory_space<vmem>>, vector<1x32xf32>
    %6 = vector.broadcast %5 : vector<1x32xf32> to vector<128x32xf32>
    %7 = arith.addf %4, %6 : vector<128x32xf32>
    %cst_6 = arith.constant 0.000000e+00 : f32
    %8 = vector.broadcast %cst_6 : f32 to vector<128x32xf32>
    %9 = arith.maximumf %7, %8 : vector<128x32xf32>
    %c0_7 = arith.constant 0 : index
    %c0_8 = arith.constant 0 : index
    %10 = vector.load %arg4[%c0_7, %c0_8] : memref<128x32xf32, #tpu.memory_space<vmem>>, vector<128x32xf32>
    tpu.vector_store %arg4[%c0_7, %c0_8], %9 {strides = array<i32>} : memref<128x32xf32, #tpu.memory_space<vmem>>, vector<128x32xf32>,
    return
  }
  func.func @transform_0(%arg0: i32) -> (i32, i32) {
    %c0_i32 = arith.constant 0 : i32
    %c0_i32_0 = arith.constant 0 : i32
    return %arg0, %c0_i32 : i32, i32
  }
  func.func @transform_1(%arg0: i32) -> (i32, i32) {
    %c0_i32 = arith.constant 0 : i32
    %c0_i32_0 = arith.constant 0 : i32
    %c0_i32_1 = arith.constant 0 : i32
    return %c0_i32, %c0_i32_0 : i32, i32
  }
  func.func @transform_2(%arg0: i32) -> (i32, i32) {
    %c0_i32 = arith.constant 0 : i32
    %c0_i32_0 = arith.constant 0 : i32
    %c0_i32_1 = arith.constant 0 : i32
    return %c0_i32, %c0_i32_0 : i32, i32
  }
  func.func @transform_3(%arg0: i32) -> (i32, i32) {
    %c0_i32 = arith.constant 0 : i32
    %c0_i32_0 = arith.constant 0 : i32
    return %arg0, %c0_i32 : i32, i32
  }
}

module attributes {stable_mosaic.version = 11 : i64} {
  func.func @_matmul_bias_kernel(%arg0: i32, %arg1: memref<18x512xf32, #tpu.memory_space<vmem>>, %arg2: memref<512x64xf32, #tpu.memory_space<vmem>>, %arg3: memref<1x64xf32, #tpu.memory_space<vmem>>, %arg4: memref<18x64xf32, #tpu.memory_space<vmem>>) attributes {dimension_semantics = [#tpu.dimension_semantics<parallel>], iteration_bounds = array<i64: 1>, scalar_prefetch = 0 : i64, scratch_operands = 0 : i64, tpu.core_type = #tpu.core_type<tc>, window_params = [{transform_indices = @transform_0, window_bounds = array<i64: 18, 512>}, {pipeline_mode = #tpu.pipeline_mode<synchronous>, transform_indices = @transform_1, window_bounds = array<i64: 512, 64>}, {pipeline_mode = #tpu.pipeline_mode<synchronous>, transform_indices = @transform_2, window_bounds = array<i64: 1, 64>}, {transform_indices = @transform_3, window_bounds = array<i64: 18, 64>}]} {
    %c0 = arith.constant 0 : index
    %c0_0 = arith.constant 0 : index
    %0 = vector.load %arg2[%c0, %c0_0] : memref<512x64xf32, #tpu.memory_space<vmem>>, vector<512x64xf32>
    %c0_1 = arith.constant 0 : index
    %c0_2 = arith.constant 0 : index
    %1 = vector.load %arg1[%c0_1, %c0_2] : memref<18x512xf32, #tpu.memory_space<vmem>>, vector<18x512xf32>
    %cst = arith.constant dense<0.000000e+00> : vector<18x64xf32>
    %2 = tpu.matmul %1, %0, %cst {dimension_numbers = #tpu.dot_dimension_numbers<[1], [0], [0], [1], [0, 0, 1, 1], [], []>} : vector<18x512xf32>, vector<512x64xf32>, vector<18x64xf32> -> vector<18x64xf32>
    %c0_3 = arith.constant 0 : index
    %c0_4 = arith.constant 0 : index
    %3 = vector.load %arg3[%c0_3, %c0_4] : memref<1x64xf32, #tpu.memory_space<vmem>>, vector<1x64xf32>
    %4 = vector.broadcast %3 : vector<1x64xf32> to vector<18x64xf32>
    %5 = arith.addf %2, %4 : vector<18x64xf32>
    %cst_5 = arith.constant 0.000000e+00 : f32
    %6 = vector.broadcast %cst_5 : f32 to vector<18x64xf32>
    %7 = arith.maximumf %5, %6 : vector<18x64xf32>
    %c0_6 = arith.constant 0 : index
    %c0_7 = arith.constant 0 : index
    %8 = vector.load %arg4[%c0_6, %c0_7] : memref<18x64xf32, #tpu.memory_space<vmem>>, vector<18x64xf32>
    tpu.vector_store %arg4[%c0_6, %c0_7], %7 {strides = array<i32>} : memref<18x64xf32, #tpu.memory_space<vmem>>, vector<18x64xf32>,
    return
  }
  func.func @transform_0(%arg0: i32) -> (i32, i32) {
    %c0_i32 = arith.constant 0 : i32
    %c0_i32_0 = arith.constant 0 : i32
    return %arg0, %c0_i32 : i32, i32
  }
  func.func @transform_1(%arg0: i32) -> (i32, i32) {
    %c0_i32 = arith.constant 0 : i32
    %c0_i32_0 = arith.constant 0 : i32
    %c0_i32_1 = arith.constant 0 : i32
    return %c0_i32, %c0_i32_0 : i32, i32
  }
  func.func @transform_2(%arg0: i32) -> (i32, i32) {
    %c0_i32 = arith.constant 0 : i32
    %c0_i32_0 = arith.constant 0 : i32
    %c0_i32_1 = arith.constant 0 : i32
    return %c0_i32, %c0_i32_0 : i32, i32
  }
  func.func @transform_3(%arg0: i32) -> (i32, i32) {
    %c0_i32 = arith.constant 0 : i32
    %c0_i32_0 = arith.constant 0 : i32
    return %arg0, %c0_i32 : i32, i32
  }
}

module attributes {stable_mosaic.version = 11 : i64} {
  func.func @_matmul_bias_kernel(%arg0: i32, %arg1: memref<2x576xf32, #tpu.memory_space<vmem>>, %arg2: memref<576x64xf32, #tpu.memory_space<vmem>>, %arg3: memref<1x64xf32, #tpu.memory_space<vmem>>, %arg4: memref<2x64xf32, #tpu.memory_space<vmem>>) attributes {dimension_semantics = [#tpu.dimension_semantics<parallel>], iteration_bounds = array<i64: 1>, scalar_prefetch = 0 : i64, scratch_operands = 0 : i64, tpu.core_type = #tpu.core_type<tc>, window_params = [{transform_indices = @transform_0, window_bounds = array<i64: 2, 576>}, {pipeline_mode = #tpu.pipeline_mode<synchronous>, transform_indices = @transform_1, window_bounds = array<i64: 576, 64>}, {pipeline_mode = #tpu.pipeline_mode<synchronous>, transform_indices = @transform_2, window_bounds = array<i64: 1, 64>}, {transform_indices = @transform_3, window_bounds = array<i64: 2, 64>}]} {
    %c0 = arith.constant 0 : index
    %c0_0 = arith.constant 0 : index
    %0 = vector.load %arg2[%c0, %c0_0] : memref<576x64xf32, #tpu.memory_space<vmem>>, vector<576x64xf32>
    %c0_1 = arith.constant 0 : index
    %c0_2 = arith.constant 0 : index
    %1 = vector.load %arg1[%c0_1, %c0_2] : memref<2x576xf32, #tpu.memory_space<vmem>>, vector<2x576xf32>
    %cst = arith.constant dense<0.000000e+00> : vector<2x64xf32>
    %2 = tpu.matmul %1, %0, %cst {dimension_numbers = #tpu.dot_dimension_numbers<[1], [0], [0], [1], [0, 0, 1, 1], [], []>} : vector<2x576xf32>, vector<576x64xf32>, vector<2x64xf32> -> vector<2x64xf32>
    %c0_3 = arith.constant 0 : index
    %c0_4 = arith.constant 0 : index
    %3 = vector.load %arg3[%c0_3, %c0_4] : memref<1x64xf32, #tpu.memory_space<vmem>>, vector<1x64xf32>
    %4 = vector.broadcast %3 : vector<1x64xf32> to vector<2x64xf32>
    %5 = arith.addf %2, %4 : vector<2x64xf32>
    %cst_5 = arith.constant 0.000000e+00 : f32
    %6 = vector.broadcast %cst_5 : f32 to vector<2x64xf32>
    %7 = arith.maximumf %5, %6 : vector<2x64xf32>
    %c0_6 = arith.constant 0 : index
    %c0_7 = arith.constant 0 : index
    %8 = vector.load %arg4[%c0_6, %c0_7] : memref<2x64xf32, #tpu.memory_space<vmem>>, vector<2x64xf32>
    tpu.vector_store %arg4[%c0_6, %c0_7], %7 {strides = array<i32>} : memref<2x64xf32, #tpu.memory_space<vmem>>, vector<2x64xf32>,
    return
  }
  func.func @transform_0(%arg0: i32) -> (i32, i32) {
    %c0_i32 = arith.constant 0 : i32
    %c0_i32_0 = arith.constant 0 : i32
    return %arg0, %c0_i32 : i32, i32
  }
  func.func @transform_1(%arg0: i32) -> (i32, i32) {
    %c0_i32 = arith.constant 0 : i32
    %c0_i32_0 = arith.constant 0 : i32
    %c0_i32_1 = arith.constant 0 : i32
    return %c0_i32, %c0_i32_0 : i32, i32
  }
  func.func @transform_2(%arg0: i32) -> (i32, i32) {
    %c0_i32 = arith.constant 0 : i32
    %c0_i32_0 = arith.constant 0 : i32
    %c0_i32_1 = arith.constant 0 : i32
    return %c0_i32, %c0_i32_0 : i32, i32
  }
  func.func @transform_3(%arg0: i32) -> (i32, i32) {
    %c0_i32 = arith.constant 0 : i32
    %c0_i32_0 = arith.constant 0 : i32
    return %arg0, %c0_i32 : i32, i32
  }
}

module attributes {stable_mosaic.version = 11 : i64} {
  func.func @_dueling_head_kernel(%arg0: i32, %arg1: memref<2x64xf32, #tpu.memory_space<vmem>>, %arg2: memref<64x512xf32, #tpu.memory_space<vmem>>, %arg3: memref<1x512xf32, #tpu.memory_space<vmem>>, %arg4: memref<512x128xf32, #tpu.memory_space<vmem>>, %arg5: memref<1x128xf32, #tpu.memory_space<vmem>>, %arg6: memref<2x6xf32, #tpu.memory_space<vmem>>) attributes {dimension_semantics = [#tpu.dimension_semantics<parallel>], iteration_bounds = array<i64: 1>, scalar_prefetch = 0 : i64, scratch_operands = 0 : i64, tpu.core_type = #tpu.core_type<tc>, window_params = [{transform_indices = @transform_0, window_bounds = array<i64: 2, 64>}, {pipeline_mode = #tpu.pipeline_mode<synchronous>, transform_indices = @transform_1, window_bounds = array<i64: 64, 512>}, {pipeline_mode = #tpu.pipeline_mode<synchronous>, transform_indices = @transform_2, window_bounds = array<i64: 1, 512>}, {pipeline_mode = #tpu.pipeline_mode<synchronous>, transform_indices = @transform_3, window_bounds = array<i64: 512, 128>}, {pipeline_mode = #tpu.pipeline_mode<synchronous>, transform_indices = @transform_4, window_bounds = array<i64: 1, 128>}, {transform_indices = @transform_5, window_bounds = array<i64: 2, 6>}]} {
    %c0 = arith.constant 0 : index
    %c0_0 = arith.constant 0 : index
    %0 = vector.load %arg1[%c0, %c0_0] : memref<2x64xf32, #tpu.memory_space<vmem>>, vector<2x64xf32>
    %c0_1 = arith.constant 0 : index
    %c0_2 = arith.constant 0 : index
    %1 = vector.load %arg2[%c0_1, %c0_2] : memref<64x512xf32, #tpu.memory_space<vmem>>, vector<64x512xf32>
    %cst = arith.constant dense<0.000000e+00> : vector<2x512xf32>
    %2 = tpu.matmul %0, %1, %cst {dimension_numbers = #tpu.dot_dimension_numbers<[1], [0], [0], [1], [0, 0, 1, 1], [], []>} : vector<2x64xf32>, vector<64x512xf32>, vector<2x512xf32> -> vector<2x512xf32>
    %c0_3 = arith.constant 0 : index
    %c0_4 = arith.constant 0 : index
    %3 = vector.load %arg3[%c0_3, %c0_4] : memref<1x512xf32, #tpu.memory_space<vmem>>, vector<1x512xf32>
    %4 = vector.broadcast %3 : vector<1x512xf32> to vector<2x512xf32>
    %5 = arith.addf %2, %4 : vector<2x512xf32>
    %cst_5 = arith.constant 0.000000e+00 : f32
    %6 = vector.broadcast %cst_5 : f32 to vector<2x512xf32>
    %7 = arith.maximumf %5, %6 : vector<2x512xf32>
    %c0_6 = arith.constant 0 : index
    %c0_7 = arith.constant 0 : index
    %8 = vector.load %arg4[%c0_6, %c0_7] : memref<512x128xf32, #tpu.memory_space<vmem>>, vector<512x128xf32>
    %cst_8 = arith.constant dense<0.000000e+00> : vector<2x128xf32>
    %9 = tpu.matmul %7, %8, %cst_8 {dimension_numbers = #tpu.dot_dimension_numbers<[1], [0], [0], [1], [0, 0, 1, 1], [], []>} : vector<2x512xf32>, vector<512x128xf32>, vector<2x128xf32> -> vector<2x128xf32>
    %c0_9 = arith.constant 0 : index
    %c0_10 = arith.constant 0 : index
    %10 = vector.load %arg5[%c0_9, %c0_10] : memref<1x128xf32, #tpu.memory_space<vmem>>, vector<1x128xf32>
    %11 = vector.broadcast %10 : vector<1x128xf32> to vector<2x128xf32>
    %12 = arith.addf %9, %11 : vector<2x128xf32>
    %13 = vector.extract_strided_slice %12 {offsets = [0, 0], sizes = [2, 6], strides = [1, 1]} : vector<2x128xf32> to vector<2x6xf32>
    %14 = vector.extract_strided_slice %12 {offsets = [0, 6], sizes = [2, 1], strides = [1, 1]} : vector<2x128xf32> to vector<2x1xf32>
    %cst_11 = arith.constant dense<0.000000e+00> : vector<2xf32>
    %15 = vector.multi_reduction <add>, %13, %cst_11 [1] : vector<2x6xf32> to vector<2xf32>
    %16 = vector.shape_cast %15 : vector<2xf32> to vector<2x1xf32>
    %cst_12 = arith.constant 6.000000e+00 : f32
    %17 = vector.broadcast %cst_12 : f32 to vector<2x1xf32>
    %18 = arith.divf %16, %17 : vector<2x1xf32>
    %19 = vector.broadcast %18 : vector<2x1xf32> to vector<2x6xf32>
    %20 = arith.subf %13, %19 : vector<2x6xf32>
    %21 = vector.broadcast %14 : vector<2x1xf32> to vector<2x6xf32>
    %22 = arith.addf %21, %20 : vector<2x6xf32>
    %c0_13 = arith.constant 0 : index
    %c0_14 = arith.constant 0 : index
    %23 = vector.load %arg6[%c0_13, %c0_14] : memref<2x6xf32, #tpu.memory_space<vmem>>, vector<2x6xf32>
    tpu.vector_store %arg6[%c0_13, %c0_14], %22 {strides = array<i32>} : memref<2x6xf32, #tpu.memory_space<vmem>>, vector<2x6xf32>,
    return
  }
  func.func @transform_0(%arg0: i32) -> (i32, i32) {
    %c0_i32 = arith.constant 0 : i32
    %c0_i32_0 = arith.constant 0 : i32
    return %arg0, %c0_i32 : i32, i32
  }
  func.func @transform_1(%arg0: i32) -> (i32, i32) {
    %c0_i32 = arith.constant 0 : i32
    %c0_i32_0 = arith.constant 0 : i32
    %c0_i32_1 = arith.constant 0 : i32
    return %c0_i32, %c0_i32_0 : i32, i32
  }
  func.func @transform_2(%arg0: i32) -> (i32, i32) {
    %c0_i32 = arith.constant 0 : i32
    %c0_i32_0 = arith.constant 0 : i32
    %c0_i32_1 = arith.constant 0 : i32
    return %c0_i32, %c0_i32_0 : i32, i32
  }
  func.func @transform_3(%arg0: i32) -> (i32, i32) {
    %c0_i32 = arith.constant 0 : i32
    %c0_i32_0 = arith.constant 0 : i32
    %c0_i32_1 = arith.constant 0 : i32
    return %c0_i32, %c0_i32_0 : i32, i32
  }
  func.func @transform_4(%arg0: i32) -> (i32, i32) {
    %c0_i32 = arith.constant 0 : i32
    %c0_i32_0 = arith.constant 0 : i32
    %c0_i32_1 = arith.constant 0 : i32
    return %c0_i32, %c0_i32_0 : i32, i32
  }
  func.func @transform_5(%arg0: i32) -> (i32, i32) {
    %c0_i32 = arith.constant 0 : i32
    %c0_i32_0 = arith.constant 0 : i32
    return %arg0, %c0_i32 : i32, i32
  }
}

</mosaic_0001>

<llo_original>
// kernel: duel_noisy_dqn_forward.5
$region0: #{duel_noisy_dqn_forward.5}
  #allocation0 [shape = 'u32[]', space=smem, size = 0x4, offset = 0x4, fixed_abs, tag = 'smem constant byte address 0x4 - core index']
  #allocation1 [shape = 'u32[144,128]{1,0:T(1,128)}', space=vmem, size = 0x12000, scoped, tag = 'internal scratch']
  %s0 = inlined_call_operand.vmem [shape: f32[18,512], index: 0, kind: input, shape index: {}]
  %s1 = inlined_call_operand.vmem [shape: f32[512,64], index: 1, kind: input, shape index: {}]
  %s2 = inlined_call_operand.vmem [shape: f32[1,64], index: 2, kind: input, shape index: {}]
  %s3 = inlined_call_operand.vmem [shape: f32[18,64], index: 3, kind: output, shape index: {}]
  %s4 = sld [smem:[#allocation0]]
  $region22: #{duel_noisy_dqn_forward.5} parent=0
    _
  %s6 = ssub.s32 1, %s4
  %s7 = scalar_select 0, %s6, %s4
  // Predicated region
  $region2: #{duel_noisy_dqn_forward.5} parent=0 // pred_check
    _
  $region3: #{duel_noisy_dqn_forward.5} parent=0 // pred_check_branch
    %9 = sbr.rel (0) target = $region5
  $region4: #{duel_noisy_dqn_forward.5} parent=0 // pred_region
    _
  $region5: #{duel_noisy_dqn_forward.5} parent=0 // pred_fallthru
    _
  // Predicated region
  $region6: #{duel_noisy_dqn_forward.5} parent=0 // pred_check
    _
  $region7: #{duel_noisy_dqn_forward.5} parent=0 // pred_check_branch
    %11 = sbr.rel (0) target = $region9
  $region8: #{duel_noisy_dqn_forward.5} parent=0 // pred_region
    _
  $region9: #{duel_noisy_dqn_forward.5} parent=0 // pred_fallthru
    _
  // Predicated region
  $region10: #{duel_noisy_dqn_forward.5} parent=0 // pred_check
    _
  $region11: #{duel_noisy_dqn_forward.5} parent=0 // pred_check_branch
    %13 = sbr.rel (0) target = $region13
  $region12: #{duel_noisy_dqn_forward.5} parent=0 // pred_region
    _
  $region13: #{duel_noisy_dqn_forward.5} parent=0 // pred_fallthru
    _
  %v14 = vld [vmem:[%s1] sm:$0xff]
  %v15 = vld [vmem:[%s1 + $0x8] sm:$0xff]
  %v16 = vld [vmem:[%s1 + $0x10] sm:$0xff]
  %v17 = vld [vmem:[%s1 + $0x18] sm:$0xff]
  %v18 = vld [vmem:[%s1 + $0x20] sm:$0xff]
  %v19 = vld [vmem:[%s1 + $0x28] sm:$0xff]
  %v20 = vld [vmem:[%s1 + $0x30] sm:$0xff]
  %v21 = vld [vmem:[%s1 + $0x38] sm:$0xff]
  %v22 = vld [vmem:[%s1 + $0x40] sm:$0xff]
  %v23 = vld [vmem:[%s1 + $0x48] sm:$0xff]
  %v24 = vld [vmem:[%s1 + $0x50] sm:$0xff]
  %v25 = vld [vmem:[%s1 + $0x58] sm:$0xff]
  %v26 = vld [vmem:[%s1 + $0x60] sm:$0xff]
  %v27 = vld [vmem:[%s1 + $0x68] sm:$0xff]
  %v28 = vld [vmem:[%s1 + $0x70] sm:$0xff]
  %v29 = vld [vmem:[%s1 + $0x78] sm:$0xff]
  %v30 = vld [vmem:[%s1 + $0x80] sm:$0xff]
  %v31 = vld [vmem:[%s1 + $0x88] sm:$0xff]
  %v32 = vld [vmem:[%s1 + $0x90] sm:$0xff]
  %v33 = vld [vmem:[%s1 + $0x98] sm:$0xff]
  %v34 = vld [vmem:[%s1 + $0xa0] sm:$0xff]
  %v35 = vld [vmem:[%s1 + $0xa8] sm:$0xff]
  %v36 = vld [vmem:[%s1 + $0xb0] sm:$0xff]
  %v37 = vld [vmem:[%s1 + $0xb8] sm:$0xff]
  %v38 = vld [vmem:[%s1 + $0xc0] sm:$0xff]
  %v39 = vld [vmem:[%s1 + $0xc8] sm:$0xff]
  %v40 = vld [vmem:[%s1 + $0xd0] sm:$0xff]
  %v41 = vld [vmem:[%s1 + $0xd8] sm:$0xff]
  %v42 = vld [vmem:[%s1 + $0xe0] sm:$0xff]
  %v43 = vld [vmem:[%s1 + $0xe8] sm:$0xff]
  %v44 = vld [vmem:[%s1 + $0xf0] sm:$0xff]
  %v45 = vld [vmem:[%s1 + $0xf8] sm:$0xff]
  %v46 = vld [vmem:[%s1 + $0x100] sm:$0xff]
  %v47 = vld [vmem:[%s1 + $0x108] sm:$0xff]
  %v48 = vld [vmem:[%s1 + $0x110] sm:$0xff]
  %v49 = vld [vmem:[%s1 + $0x118] sm:$0xff]
  %v50 = vld [vmem:[%s1 + $0x120] sm:$0xff]
  %v51 = vld [vmem:[%s1 + $0x128] sm:$0xff]
  %v52 = vld [vmem:[%s1 + $0x130] sm:$0xff]
  %v53 = vld [vmem:[%s1 + $0x138] sm:$0xff]
  %v54 = vld [vmem:[%s1 + $0x140] sm:$0xff]
  %v55 = vld [vmem:[%s1 + $0x148] sm:$0xff]
  %v56 = vld [vmem:[%s1 + $0x150] sm:$0xff]
  %v57 = vld [vmem:[%s1 + $0x158] sm:$0xff]
  %v58 = vld [vmem:[%s1 + $0x160] sm:$0xff]
  %v59 = vld [vmem:[%s1 + $0x168] sm:$0xff]
  %v60 = vld [vmem:[%s1 + $0x170] sm:$0xff]
  %v61 = vld [vmem:[%s1 + $0x178] sm:$0xff]
  %v62 = vld [vmem:[%s1 + $0x180] sm:$0xff]
  %v63 = vld [vmem:[%s1 + $0x188] sm:$0xff]
  %v64 = vld [vmem:[%s1 + $0x190] sm:$0xff]
  %v65 = vld [vmem:[%s1 + $0x198] sm:$0xff]
  %v66 = vld [vmem:[%s1 + $0x1a0] sm:$0xff]
  %v67 = vld [vmem:[%s1 + $0x1a8] sm:$0xff]
  %v68 = vld [vmem:[%s1 + $0x1b0] sm:$0xff]
  %v69 = vld [vmem:[%s1 + $0x1b8] sm:$0xff]
  %v70 = vld [vmem:[%s1 + $0x1c0] sm:$0xff]
  %v71 = vld [vmem:[%s1 + $0x1c8] sm:$0xff]
  %v72 = vld [vmem:[%s1 + $0x1d0] sm:$0xff]
  %v73 = vld [vmem:[%s1 + $0x1d8] sm:$0xff]
  %v74 = vld [vmem:[%s1 + $0x1e0] sm:$0xff]
  %v75 = vld [vmem:[%s1 + $0x1e8] sm:$0xff]
  %v76 = vld [vmem:[%s1 + $0x1f0] sm:$0xff]
  %v77 = vld [vmem:[%s1 + $0x1f8] sm:$0xff]
  %v78 = vld [vmem:[%s0] sm:$0xff]
  %v79 = vld [vmem:[%s0 + $0x8] sm:$0xff]
  %v80 = vld [vmem:[%s0 + $0x10] sm:$0xff]
  %v81 = vld [vmem:[%s0 + $0x18] sm:$0xff]
  %v82 = vld [vmem:[%s0 + $0x20] sm:$0xff]
  %v83 = vld [vmem:[%s0 + $0x28] sm:$0xff]
  %v84 = vld [vmem:[%s0 + $0x30] sm:$0xff]
  %v85 = vld [vmem:[%s0 + $0x38] sm:$0xff]
  %v86 = vld [vmem:[%s0 + $0x40] sm:$0x3]
  %v87 = vld [vmem:[%s0 + $0x48] sm:$0x3]
  %v88 = vld [vmem:[%s0 + $0x50] sm:$0x3]
  %v89 = vld [vmem:[%s0 + $0x58] sm:$0x3]
  %v90 = vld [vmem:[%s2] sm:$0x1]
  %v92 = vlaneseq
  %v93 = vshrl.u32 %v92, 7
  %v94 = vsub.s32 0, %v93
  %v95 = vrot.slane %v90, %v94
  %97 = vmatprep.subr.mxu0 0.0
  %98 = vmatpush1.msra.mxu0 %v14
  %99 = vmatprep.subr.mxu0 0.0
  %100 = vmatpush1.msra.mxu0 %v15
  %101 = vmatprep.subr.mxu0 0.0
  %102 = vmatpush1.msra.mxu0 %v16
  %103 = vmatprep.subr.mxu0 0.0
  %104 = vmatpush1.msra.mxu0 %v17
  %105 = vmatprep.subr.mxu0 0.0
  %106 = vmatpush1.msra.mxu0 %v18
  %107 = vmatprep.subr.mxu0 0.0
  %108 = vmatpush1.msra.mxu0 %v19
  %109 = vmatprep.subr.mxu0 0.0
  %110 = vmatpush1.msra.mxu0 %v20
  %111 = vmatprep.subr.mxu0 0.0
  %112 = vmatpush1.msra.mxu0 %v21
  %113 = vmatprep.subr.mxu0 0.0
  %114 = vmatpush1.msra.mxu0 %v22
  %115 = vmatprep.subr.mxu0 0.0
  %116 = vmatpush1.msra.mxu0 %v23
  %117 = vmatprep.subr.mxu0 0.0
  %118 = vmatpush1.msra.mxu0 %v24
  %119 = vmatprep.subr.mxu0 0.0
  %120 = vmatpush1.msra.mxu0 %v25
  %121 = vmatprep.subr.mxu0 0.0
  %122 = vmatpush1.msra.mxu0 %v26
  %123 = vmatprep.subr.mxu0 0.0
  %124 = vmatpush1.msra.mxu0 %v27
  %125 = vmatprep.subr.mxu0 0.0
  %126 = vmatpush1.msra.mxu0 %v28
  %127 = vmatprep.subr.mxu0 0.0
  %128 = vmatpush1.msra.mxu0 %v29
  %129 = vmatprep.subr.mxu0 0.0
  %130 = vmatpush1.msra.mxu0 %v30
  %131 = vmatprep.subr.mxu0 0.0
  %132 = vmatpush1.msra.mxu0 %v31
  %133 = vmatprep.subr.mxu0 0.0
  %134 = vmatpush1.msra.mxu0 %v32
  %135 = vmatprep.subr.mxu0 0.0
  %136 = vmatpush1.msra.mxu0 %v33
  %137 = vmatprep.subr.mxu0 0.0
  %138 = vmatpush1.msra.mxu0 %v34
  %139 = vmatprep.subr.mxu0 0.0
  %140 = vmatpush1.msra.mxu0 %v35
  %141 = vmatprep.subr.mxu0 0.0
  %142 = vmatpush1.msra.mxu0 %v36
  %143 = vmatprep.subr.mxu0 0.0
  %144 = vmatpush1.msra.mxu0 %v37
  %145 = vmatprep.subr.mxu0 0.0
  %146 = vmatpush1.msra.mxu0 %v38
  %147 = vmatprep.subr.mxu0 0.0
  %148 = vmatpush1.msra.mxu0 %v39
  %149 = vmatprep.subr.mxu0 0.0
  %150 = vmatpush1.msra.mxu0 %v40
  %151 = vmatprep.subr.mxu0 0.0
  %152 = vmatpush1.msra.mxu0 %v41
  %153 = vmatprep.subr.mxu0 0.0
  %154 = vmatpush1.msra.mxu0 %v42
  %155 = vmatprep.subr.mxu0 0.0
  %156 = vmatpush1.msra.mxu0 %v43
  %157 = vmatprep.subr.mxu0 0.0
  %158 = vmatpush1.msra.mxu0 %v44
  %159 = vmatprep.subr.mxu0 0.0
  %160 = vmatpush1.msra.mxu0 %v45
  %161 = vmatprep.mubr.f32.mxu0 %v79
  %162 = vmatmul.mubr.f32.gmra.mrb[0].mxu0 %v78
  %v163 = vpop.f32.mrb[0].mxu0
  %v164 = vadd.f32 %v95, %v163
  %v165 = vpop.f32.mrb[0].mxu0
  %166 = vmatprep.mubr.f32.mxu0 %v83
  %167 = vmatmul.mubr.f32.gmra.mrb[0].mxu0 %v82
  %v168 = vpop.f32.mrb[0].mxu0
  %v169 = vadd.f32 %v95, %v168
  %v170 = vpop.f32.mrb[0].mxu0
  %171 = vmatprep.mubr.f32.mxu0 %v87
  %172 = vmatmul.mubr.f32.gmra.mrb[0].mxu0 %v86
  %v173 = vpop.f32.mrb[0].mxu0
  %v174 = vadd.f32 %v95, %v173
  %v175 = vpop.f32.mrb[0].mxu0
  %176 = vdwg.mxu0
  %177 = vmatprep.subr.mxu0 0.0
  %178 = vmatpush1.msra.mxu0 %v46
  %179 = vmatprep.subr.mxu0 0.0
  %180 = vmatpush1.msra.mxu0 %v47
  %181 = vmatprep.subr.mxu0 0.0
  %182 = vmatpush1.msra.mxu0 %v48
  %183 = vmatprep.subr.mxu0 0.0
  %184 = vmatpush1.msra.mxu0 %v49
  %185 = vmatprep.subr.mxu0 0.0
  %186 = vmatpush1.msra.mxu0 %v50
  %187 = vmatprep.subr.mxu0 0.0
  %188 = vmatpush1.msra.mxu0 %v51
  %189 = vmatprep.subr.mxu0 0.0
  %190 = vmatpush1.msra.mxu0 %v52
  %191 = vmatprep.subr.mxu0 0.0
  %192 = vmatpush1.msra.mxu0 %v53
  %193 = vmatprep.subr.mxu0 0.0
  %194 = vmatpush1.msra.mxu0 %v54
  %195 = vmatprep.subr.mxu0 0.0
  %196 = vmatpush1.msra.mxu0 %v55
  %197 = vmatprep.subr.mxu0 0.0
  %198 = vmatpush1.msra.mxu0 %v56
  %199 = vmatprep.subr.mxu0 0.0
  %200 = vmatpush1.msra.mxu0 %v57
  %201 = vmatprep.subr.mxu0 0.0
  %202 = vmatpush1.msra.mxu0 %v58
  %203 = vmatprep.subr.mxu0 0.0
  %204 = vmatpush1.msra.mxu0 %v59
  %205 = vmatprep.subr.mxu0 0.0
  %206 = vmatpush1.msra.mxu0 %v60
  %207 = vmatprep.subr.mxu0 0.0
  %208 = vmatpush1.msra.mxu0 %v61
  %209 = vmatprep.subr.mxu0 0.0
  %210 = vmatpush1.msra.mxu0 %v62
  %211 = vmatprep.subr.mxu0 0.0
  %212 = vmatpush1.msra.mxu0 %v63
  %213 = vmatprep.subr.mxu0 0.0
  %214 = vmatpush1.msra.mxu0 %v64
  %215 = vmatprep.subr.mxu0 0.0
  %216 = vmatpush1.msra.mxu0 %v65
  %217 = vmatprep.subr.mxu0 0.0
  %218 = vmatpush1.msra.mxu0 %v66
  %219 = vmatprep.subr.mxu0 0.0
  %220 = vmatpush1.msra.mxu0 %v67
  %221 = vmatprep.subr.mxu0 0.0
  %222 = vmatpush1.msra.mxu0 %v68
  %223 = vmatprep.subr.mxu0 0.0
  %224 = vmatpush1.msra.mxu0 %v69
  %225 = vmatprep.subr.mxu0 0.0
  %226 = vmatpush1.msra.mxu0 %v70
  %227 = vmatprep.subr.mxu0 0.0
  %228 = vmatpush1.msra.mxu0 %v71
  %229 = vmatprep.subr.mxu0 0.0
  %230 = vmatpush1.msra.mxu0 %v72
  %231 = vmatprep.subr.mxu0 0.0
  %232 = vmatpush1.msra.mxu0 %v73
  %233 = vmatprep.subr.mxu0 0.0
  %234 = vmatpush1.msra.mxu0 %v74
  %235 = vmatprep.subr.mxu0 0.0
  %236 = vmatpush1.msra.mxu0 %v75
  %237 = vmatprep.subr.mxu0 0.0
  %238 = vmatpush1.msra.mxu0 %v76
  %239 = vmatprep.subr.mxu0 0.0
  %240 = vmatpush1.msra.mxu0 %v77
  %241 = vmatprep.mubr.f32.mxu0 %v81
  %242 = vmatmul.mubr.f32.gmra.mrb[0].mxu0 %v80
  %v243 = vpop.f32.mrb[0].mxu0
  %v244 = vadd.f32 %v164, %v243
  %v245 = vpop.f32.mrb[0].mxu0
  %246 = vmatprep.mubr.f32.mxu0 %v85
  %247 = vmatmul.mubr.f32.gmra.mrb[0].mxu0 %v84
  %v248 = vpop.f32.mrb[0].mxu0
  %v249 = vadd.f32 %v169, %v248
  %v250 = vpop.f32.mrb[0].mxu0
  %251 = vmatprep.mubr.f32.mxu0 %v89
  %252 = vmatmul.mubr.f32.gmra.mrb[0].mxu0 %v88
  %v253 = vpop.f32.mrb[0].mxu0
  %v254 = vadd.f32 %v174, %v253
  %v255 = vpop.f32.mrb[0].mxu0
  %256 = vdwg.mxu0
  %v257 = vmax.f32 %v244, 0.0
  %v258 = vmax.f32 %v249, 0.0
  %v259 = vmax.f32 %v254, 0.0
  %vm260 = vcmask 523264
  %261 = vst.msk [vmem:[%s3] sm:$0xff] %vm260, %v257
  %262 = vst.msk [vmem:[%s3 + $0x8] sm:$0xff] %vm260, %v258
  %vm263 = vcmask 517120
  %264 = vst.msk [vmem:[%s3 + $0x10] sm:$0x3] %vm263, %v259
  // Predicated region
  $region14: #{duel_noisy_dqn_forward.5} parent=0 // pred_check
    _
  $region15: #{duel_noisy_dqn_forward.5} parent=0 // pred_check_branch
    %266 = sbr.rel (0) target = $region17
  $region16: #{duel_noisy_dqn_forward.5} parent=0 // pred_region
    _
  $region17: #{duel_noisy_dqn_forward.5} parent=0 // pred_fallthru
    _
  // Predicated region
  $region18: #{duel_noisy_dqn_forward.5} parent=0 // pred_check
    _
  $region19: #{duel_noisy_dqn_forward.5} parent=0 // pred_check_branch
    %268 = sbr.rel (0) target = $region21
  $region20: #{duel_noisy_dqn_forward.5} parent=0 // pred_region
    _
  $region21: #{duel_noisy_dqn_forward.5} parent=0 // pred_fallthru
    _

// kernel: duel_noisy_dqn_forward.4
$region0: #{duel_noisy_dqn_forward.4}
  #allocation0 [shape = 'u32[]', space=smem, size = 0x4, offset = 0x4, fixed_abs, tag = 'smem constant byte address 0x4 - core index']
  #allocation1 [shape = 'u32[144,128]{1,0:T(1,128)}', space=vmem, size = 0x12000, scoped, tag = 'internal scratch']
  %s0 = inlined_call_operand.vmem [shape: f32[128,256], index: 0, kind: input, shape index: {}]
  %s1 = inlined_call_operand.vmem [shape: f32[256,32], index: 1, kind: input, shape index: {}]
  %s2 = inlined_call_operand.vmem [shape: f32[1,32], index: 2, kind: input, shape index: {}]
  %s3 = inlined_call_operand.vmem [shape: f32[128,32], index: 3, kind: output, shape index: {}]
  %s4 = sld [smem:[#allocation0]]
  $region22: #{duel_noisy_dqn_forward.4} parent=0
    _
  %s6 = ssub.s32 1, %s4
  %s7 = scalar_select 0, %s6, %s4
  // Predicated region
  $region2: #{duel_noisy_dqn_forward.4} parent=0 // pred_check
    _
  $region3: #{duel_noisy_dqn_forward.4} parent=0 // pred_check_branch
    %9 = sbr.rel (0) target = $region5
  $region4: #{duel_noisy_dqn_forward.4} parent=0 // pred_region
    _
  $region5: #{duel_noisy_dqn_forward.4} parent=0 // pred_fallthru
    _
  // Predicated region
  $region6: #{duel_noisy_dqn_forward.4} parent=0 // pred_check
    _
  $region7: #{duel_noisy_dqn_forward.4} parent=0 // pred_check_branch
    %11 = sbr.rel (0) target = $region9
  $region8: #{duel_noisy_dqn_forward.4} parent=0 // pred_region
    _
  $region9: #{duel_noisy_dqn_forward.4} parent=0 // pred_fallthru
    _
  // Predicated region
  $region10: #{duel_noisy_dqn_forward.4} parent=0 // pred_check
    _
  $region11: #{duel_noisy_dqn_forward.4} parent=0 // pred_check_branch
    %13 = sbr.rel (0) target = $region13
  $region12: #{duel_noisy_dqn_forward.4} parent=0 // pred_region
    _
  $region13: #{duel_noisy_dqn_forward.4} parent=0 // pred_fallthru
    _
  %v14 = vld [vmem:[%s1] sm:$0xff]
  %v15 = vld [vmem:[%s1 + $0x8] sm:$0xff]
  %v16 = vld [vmem:[%s1 + $0x10] sm:$0xff]
  %v17 = vld [vmem:[%s1 + $0x18] sm:$0xff]
  %v18 = vld [vmem:[%s1 + $0x20] sm:$0xff]
  %v19 = vld [vmem:[%s1 + $0x28] sm:$0xff]
  %v20 = vld [vmem:[%s1 + $0x30] sm:$0xff]
  %v21 = vld [vmem:[%s1 + $0x38] sm:$0xff]
  %v22 = vld [vmem:[%s1 + $0x40] sm:$0xff]
  %v23 = vld [vmem:[%s1 + $0x48] sm:$0xff]
  %v24 = vld [vmem:[%s1 + $0x50] sm:$0xff]
  %v25 = vld [vmem:[%s1 + $0x58] sm:$0xff]
  %v26 = vld [vmem:[%s1 + $0x60] sm:$0xff]
  %v27 = vld [vmem:[%s1 + $0x68] sm:$0xff]
  %v28 = vld [vmem:[%s1 + $0x70] sm:$0xff]
  %v29 = vld [vmem:[%s1 + $0x78] sm:$0xff]
  %v30 = vld [vmem:[%s1 + $0x80] sm:$0xff]
  %v31 = vld [vmem:[%s1 + $0x88] sm:$0xff]
  %v32 = vld [vmem:[%s1 + $0x90] sm:$0xff]
  %v33 = vld [vmem:[%s1 + $0x98] sm:$0xff]
  %v34 = vld [vmem:[%s1 + $0xa0] sm:$0xff]
  %v35 = vld [vmem:[%s1 + $0xa8] sm:$0xff]
  %v36 = vld [vmem:[%s1 + $0xb0] sm:$0xff]
  %v37 = vld [vmem:[%s1 + $0xb8] sm:$0xff]
  %v38 = vld [vmem:[%s1 + $0xc0] sm:$0xff]
  %v39 = vld [vmem:[%s1 + $0xc8] sm:$0xff]
  %v40 = vld [vmem:[%s1 + $0xd0] sm:$0xff]
  %v41 = vld [vmem:[%s1 + $0xd8] sm:$0xff]
  %v42 = vld [vmem:[%s1 + $0xe0] sm:$0xff]
  %v43 = vld [vmem:[%s1 + $0xe8] sm:$0xff]
  %v44 = vld [vmem:[%s1 + $0xf0] sm:$0xff]
  %v45 = vld [vmem:[%s1 + $0xf8] sm:$0xff]
  %v46 = vmul.f32 %v14, 0.00390625
  %v47 = vmul.f32 %v15, 0.00390625
  %v48 = vmul.f32 %v16, 0.00390625
  %v49 = vmul.f32 %v17, 0.00390625
  %v50 = vmul.f32 %v18, 0.00390625
  %v51 = vmul.f32 %v19, 0.00390625
  %v52 = vmul.f32 %v20, 0.00390625
  %v53 = vmul.f32 %v21, 0.00390625
  %v54 = vmul.f32 %v22, 0.00390625
  %v55 = vmul.f32 %v23, 0.00390625
  %v56 = vmul.f32 %v24, 0.00390625
  %v57 = vmul.f32 %v25, 0.00390625
  %v58 = vmul.f32 %v26, 0.00390625
  %v59 = vmul.f32 %v27, 0.00390625
  %v60 = vmul.f32 %v28, 0.00390625
  %v61 = vmul.f32 %v29, 0.00390625
  %v62 = vmul.f32 %v30, 0.00390625
  %v63 = vmul.f32 %v31, 0.00390625
  %v64 = vmul.f32 %v32, 0.00390625
  %v65 = vmul.f32 %v33, 0.00390625
  %v66 = vmul.f32 %v34, 0.00390625
  %v67 = vmul.f32 %v35, 0.00390625
  %v68 = vmul.f32 %v36, 0.00390625
  %v69 = vmul.f32 %v37, 0.00390625
  %v70 = vmul.f32 %v38, 0.00390625
  %v71 = vmul.f32 %v39, 0.00390625
  %v72 = vmul.f32 %v40, 0.00390625
  %v73 = vmul.f32 %v41, 0.00390625
  %v74 = vmul.f32 %v42, 0.00390625
  %v75 = vmul.f32 %v43, 0.00390625
  %v76 = vmul.f32 %v44, 0.00390625
  %v77 = vmul.f32 %v45, 0.00390625
  %v78 = vld [vmem:[%s0] sm:$0xff]
  %v79 = vld [vmem:[%s0 + $0x8] sm:$0xff]
  %v80 = vld [vmem:[%s0 + $0x10] sm:$0xff]
  %v81 = vld [vmem:[%s0 + $0x18] sm:$0xff]
  %v82 = vld [vmem:[%s0 + $0x20] sm:$0xff]
  %v83 = vld [vmem:[%s0 + $0x28] sm:$0xff]
  %v84 = vld [vmem:[%s0 + $0x30] sm:$0xff]
  %v85 = vld [vmem:[%s0 + $0x38] sm:$0xff]
  %v86 = vld [vmem:[%s0 + $0x40] sm:$0xff]
  %v87 = vld [vmem:[%s0 + $0x48] sm:$0xff]
  %v88 = vld [vmem:[%s0 + $0x50] sm:$0xff]
  %v89 = vld [vmem:[%s0 + $0x58] sm:$0xff]
  %v90 = vld [vmem:[%s0 + $0x60] sm:$0xff]
  %v91 = vld [vmem:[%s0 + $0x68] sm:$0xff]
  %v92 = vld [vmem:[%s0 + $0x70] sm:$0xff]
  %v93 = vld [vmem:[%s0 + $0x78] sm:$0xff]
  %v94 = vld [vmem:[%s0 + $0x80] sm:$0xff]
  %v95 = vld [vmem:[%s0 + $0x88] sm:$0xff]
  %v96 = vld [vmem:[%s0 + $0x90] sm:$0xff]
  %v97 = vld [vmem:[%s0 + $0x98] sm:$0xff]
  %v98 = vld [vmem:[%s0 + $0xa0] sm:$0xff]
  %v99 = vld [vmem:[%s0 + $0xa8] sm:$0xff]
  %v100 = vld [vmem:[%s0 + $0xb0] sm:$0xff]
  %v101 = vld [vmem:[%s0 + $0xb8] sm:$0xff]
  %v102 = vld [vmem:[%s0 + $0xc0] sm:$0xff]
  %v103 = vld [vmem:[%s0 + $0xc8] sm:$0xff]
  %v104 = vld [vmem:[%s0 + $0xd0] sm:$0xff]
  %v105 = vld [vmem:[%s0 + $0xd8] sm:$0xff]
  %v106 = vld [vmem:[%s0 + $0xe0] sm:$0xff]
  %v107 = vld [vmem:[%s0 + $0xe8] sm:$0xff]
  %v108 = vld [vmem:[%s0 + $0xf0] sm:$0xff]
  %v109 = vld [vmem:[%s0 + $0xf8] sm:$0xff]
  %v110 = vld [vmem:[%s2] sm:$0x1]
  %v112 = vlaneseq
  %v113 = vshrl.u32 %v112, 7
  %v114 = vsub.s32 0, %v113
  %v115 = vrot.slane %v110, %v114
  %117 = vmatprep.subr.mxu0 0.0
  %118 = vmatpush1.msra.mxu0 %v46
  %119 = vmatprep.subr.mxu0 0.0
  %120 = vmatpush1.msra.mxu0 %v47
  %121 = vmatprep.subr.mxu0 0.0
  %122 = vmatpush1.msra.mxu0 %v48
  %123 = vmatprep.subr.mxu0 0.0
  %124 = vmatpush1.msra.mxu0 %v49
  %125 = vmatprep.subr.mxu0 0.0
  %126 = vmatpush1.msra.mxu0 %v50
  %127 = vmatprep.subr.mxu0 0.0
  %128 = vmatpush1.msra.mxu0 %v51
  %129 = vmatprep.subr.mxu0 0.0
  %130 = vmatpush1.msra.mxu0 %v52
  %131 = vmatprep.subr.mxu0 0.0
  %132 = vmatpush1.msra.mxu0 %v53
  %133 = vmatprep.subr.mxu0 0.0
  %134 = vmatpush1.msra.mxu0 %v54
  %135 = vmatprep.subr.mxu0 0.0
  %136 = vmatpush1.msra.mxu0 %v55
  %137 = vmatprep.subr.mxu0 0.0
  %138 = vmatpush1.msra.mxu0 %v56
  %139 = vmatprep.subr.mxu0 0.0
  %140 = vmatpush1.msra.mxu0 %v57
  %141 = vmatprep.subr.mxu0 0.0
  %142 = vmatpush1.msra.mxu0 %v58
  %143 = vmatprep.subr.mxu0 0.0
  %144 = vmatpush1.msra.mxu0 %v59
  %145 = vmatprep.subr.mxu0 0.0
  %146 = vmatpush1.msra.mxu0 %v60
  %147 = vmatprep.subr.mxu0 0.0
  %148 = vmatpush1.msra.mxu0 %v61
  %149 = vmatprep.subr.mxu0 0.0
  %150 = vmatpush1.msra.mxu0 %v62
  %151 = vmatprep.subr.mxu0 0.0
  %152 = vmatpush1.msra.mxu0 %v63
  %153 = vmatprep.subr.mxu0 0.0
  %154 = vmatpush1.msra.mxu0 %v64
  %155 = vmatprep.subr.mxu0 0.0
  %156 = vmatpush1.msra.mxu0 %v65
  %157 = vmatprep.subr.mxu0 0.0
  %158 = vmatpush1.msra.mxu0 %v66
  %159 = vmatprep.subr.mxu0 0.0
  %160 = vmatpush1.msra.mxu0 %v67
  %161 = vmatprep.subr.mxu0 0.0
  %162 = vmatpush1.msra.mxu0 %v68
  %163 = vmatprep.subr.mxu0 0.0
  %164 = vmatpush1.msra.mxu0 %v69
  %165 = vmatprep.subr.mxu0 0.0
  %166 = vmatpush1.msra.mxu0 %v70
  %167 = vmatprep.subr.mxu0 0.0
  %168 = vmatpush1.msra.mxu0 %v71
  %169 = vmatprep.subr.mxu0 0.0
  %170 = vmatpush1.msra.mxu0 %v72
  %171 = vmatprep.subr.mxu0 0.0
  %172 = vmatpush1.msra.mxu0 %v73
  %173 = vmatprep.subr.mxu0 0.0
  %174 = vmatpush1.msra.mxu0 %v74
  %175 = vmatprep.subr.mxu0 0.0
  %176 = vmatpush1.msra.mxu0 %v75
  %177 = vmatprep.subr.mxu0 0.0
  %178 = vmatpush1.msra.mxu0 %v76
  %179 = vmatprep.subr.mxu0 0.0
  %180 = vmatpush1.msra.mxu0 %v77
  %181 = vmatprep.mubr.f32.mxu0 %v79
  %182 = vmatmul.mubr.f32.gmra.mrb[0].mxu0 %v78
  %v183 = vpop.f32.mrb[0].mxu0
  %v184 = vadd.f32 %v115, %v183
  %v185 = vpop.f32.mrb[0].mxu0
  %186 = vmatprep.mubr.f32.mxu0 %v81
  %187 = vmatmul.mubr.f32.gmra.mrb[0].mxu0 %v80
  %v188 = vpop.f32.mrb[0].mxu0
  %v189 = vadd.f32 %v115, %v188
  %v190 = vpop.f32.mrb[0].mxu0
  %191 = vmatprep.mubr.f32.mxu0 %v83
  %192 = vmatmul.mubr.f32.gmra.mrb[0].mxu0 %v82
  %v193 = vpop.f32.mrb[0].mxu0
  %v194 = vadd.f32 %v115, %v193
  %v195 = vpop.f32.mrb[0].mxu0
  %196 = vmatprep.mubr.f32.mxu0 %v85
  %197 = vmatmul.mubr.f32.gmra.mrb[0].mxu0 %v84
  %v198 = vpop.f32.mrb[0].mxu0
  %v199 = vadd.f32 %v115, %v198
  %v200 = vpop.f32.mrb[0].mxu0
  %201 = vmatprep.mubr.f32.mxu0 %v87
  %202 = vmatmul.mubr.f32.gmra.mrb[0].mxu0 %v86
  %v203 = vpop.f32.mrb[0].mxu0
  %v204 = vadd.f32 %v115, %v203
  %v205 = vpop.f32.mrb[0].mxu0
  %206 = vmatprep.mubr.f32.mxu0 %v89
  %207 = vmatmul.mubr.f32.gmra.mrb[0].mxu0 %v88
  %v208 = vpop.f32.mrb[0].mxu0
  %v209 = vadd.f32 %v115, %v208
  %v210 = vpop.f32.mrb[0].mxu0
  %211 = vmatprep.mubr.f32.mxu0 %v91
  %212 = vmatmul.mubr.f32.gmra.mrb[0].mxu0 %v90
  %v213 = vpop.f32.mrb[0].mxu0
  %v214 = vadd.f32 %v115, %v213
  %v215 = vpop.f32.mrb[0].mxu0
  %216 = vmatprep.mubr.f32.mxu0 %v93
  %217 = vmatmul.mubr.f32.gmra.mrb[0].mxu0 %v92
  %v218 = vpop.f32.mrb[0].mxu0
  %v219 = vadd.f32 %v115, %v218
  %v220 = vpop.f32.mrb[0].mxu0
  %221 = vmatprep.mubr.f32.mxu0 %v95
  %222 = vmatmul.mubr.f32.gmra.mrb[0].mxu0 %v94
  %v223 = vpop.f32.mrb[0].mxu0
  %v224 = vadd.f32 %v115, %v223
  %v225 = vpop.f32.mrb[0].mxu0
  %226 = vmatprep.mubr.f32.mxu0 %v97
  %227 = vmatmul.mubr.f32.gmra.mrb[0].mxu0 %v96
  %v228 = vpop.f32.mrb[0].mxu0
  %v229 = vadd.f32 %v115, %v228
  %v230 = vpop.f32.mrb[0].mxu0
  %231 = vmatprep.mubr.f32.mxu0 %v99
  %232 = vmatmul.mubr.f32.gmra.mrb[0].mxu0 %v98
  %v233 = vpop.f32.mrb[0].mxu0
  %v234 = vadd.f32 %v115, %v233
  %v235 = vpop.f32.mrb[0].mxu0
  %236 = vmatprep.mubr.f32.mxu0 %v101
  %237 = vmatmul.mubr.f32.gmra.mrb[0].mxu0 %v100
  %v238 = vpop.f32.mrb[0].mxu0
  %v239 = vadd.f32 %v115, %v238
  %v240 = vpop.f32.mrb[0].mxu0
  %241 = vmatprep.mubr.f32.mxu0 %v103
  %242 = vmatmul.mubr.f32.gmra.mrb[0].mxu0 %v102
  %v243 = vpop.f32.mrb[0].mxu0
  %v244 = vadd.f32 %v115, %v243
  %v245 = vpop.f32.mrb[0].mxu0
  %246 = vmatprep.mubr.f32.mxu0 %v105
  %247 = vmatmul.mubr.f32.gmra.mrb[0].mxu0 %v104
  %v248 = vpop.f32.mrb[0].mxu0
  %v249 = vadd.f32 %v115, %v248
  %v250 = vpop.f32.mrb[0].mxu0
  %251 = vmatprep.mubr.f32.mxu0 %v107
  %252 = vmatmul.mubr.f32.gmra.mrb[0].mxu0 %v106
  %v253 = vpop.f32.mrb[0].mxu0
  %v254 = vadd.f32 %v115, %v253
  %v255 = vpop.f32.mrb[0].mxu0
  %256 = vmatprep.mubr.f32.mxu0 %v109
  %257 = vmatmul.mubr.f32.gmra.mrb[0].mxu0 %v108
  %v258 = vpop.f32.mrb[0].mxu0
  %v259 = vadd.f32 %v115, %v258
  %v260 = vpop.f32.mrb[0].mxu0
  %261 = vdwg.mxu0
  %v262 = vmax.f32 %v184, 0.0
  %v263 = vmax.f32 %v189, 0.0
  %v264 = vmax.f32 %v194, 0.0
  %v265 = vmax.f32 %v199, 0.0
  %v266 = vmax.f32 %v204, 0.0
  %v267 = vmax.f32 %v209, 0.0
  %v268 = vmax.f32 %v214, 0.0
  %v269 = vmax.f32 %v219, 0.0
  %v270 = vmax.f32 %v224, 0.0
  %v271 = vmax.f32 %v229, 0.0
  %v272 = vmax.f32 %v234, 0.0
  %v273 = vmax.f32 %v239, 0.0
  %v274 = vmax.f32 %v244, 0.0
  %v275 = vmax.f32 %v249, 0.0
  %v276 = vmax.f32 %v254, 0.0
  %v277 = vmax.f32 %v259, 0.0
  %vm278 = vcmask 261120
  %279 = vst.msk [vmem:[%s3] sm:$0xff] %vm278, %v262
  %280 = vst.msk [vmem:[%s3 + $0x8] sm:$0xff] %vm278, %v263
  %281 = vst.msk [vmem:[%s3 + $0x10] sm:$0xff] %vm278, %v264
  %282 = vst.msk [vmem:[%s3 + $0x18] sm:$0xff] %vm278, %v265
  %283 = vst.msk [vmem:[%s3 + $0x20] sm:$0xff] %vm278, %v266
  %284 = vst.msk [vmem:[%s3 + $0x28] sm:$0xff] %vm278, %v267
  %285 = vst.msk [vmem:[%s3 + $0x30] sm:$0xff] %vm278, %v268
  %286 = vst.msk [vmem:[%s3 + $0x38] sm:$0xff] %vm278, %v269
  %287 = vst.msk [vmem:[%s3 + $0x40] sm:$0xff] %vm278, %v270
  %288 = vst.msk [vmem:[%s3 + $0x48] sm:$0xff] %vm278, %v271
  %289 = vst.msk [vmem:[%s3 + $0x50] sm:$0xff] %vm278, %v272
  %290 = vst.msk [vmem:[%s3 + $0x58] sm:$0xff] %vm278, %v273
  %291 = vst.msk [vmem:[%s3 + $0x60] sm:$0xff] %vm278, %v274
  %292 = vst.msk [vmem:[%s3 + $0x68] sm:$0xff] %vm278, %v275
  %293 = vst.msk [vmem:[%s3 + $0x70] sm:$0xff] %vm278, %v276
  %294 = vst.msk [vmem:[%s3 + $0x78] sm:$0xff] %vm278, %v277
  // Predicated region
  $region14: #{duel_noisy_dqn_forward.4} parent=0 // pred_check
    _
  $region15: #{duel_noisy_dqn_forward.4} parent=0 // pred_check_branch
    %296 = sbr.rel (0) target = $region17
  $region16: #{duel_noisy_dqn_forward.4} parent=0 // pred_region
    _
  $region17: #{duel_noisy_dqn_forward.4} parent=0 // pred_fallthru
    _
  // Predicated region
  $region18: #{duel_noisy_dqn_forward.4} parent=0 // pred_check
    _
  $region19: #{duel_noisy_dqn_forward.4} parent=0 // pred_check_branch
    %298 = sbr.rel (0) target = $region21
  $region20: #{duel_noisy_dqn_forward.4} parent=0 // pred_region
    _
  $region21: #{duel_noisy_dqn_forward.4} parent=0 // pred_fallthru
    _

// kernel: duel_noisy_dqn_forward.6
$region0: #{duel_noisy_dqn_forward.6}
  #allocation0 [shape = 'u32[]', space=smem, size = 0x4, offset = 0x4, fixed_abs, tag = 'smem constant byte address 0x4 - core index']
  #allocation1 [shape = 'u32[144,128]{1,0:T(1,128)}', space=vmem, size = 0x12000, scoped, tag = 'internal scratch']
  %s0 = inlined_call_operand.vmem [shape: f32[2,576], index: 0, kind: input, shape index: {}]
  %s1 = inlined_call_operand.vmem [shape: f32[576,64], index: 1, kind: input, shape index: {}]
  %s2 = inlined_call_operand.vmem [shape: f32[1,64], index: 2, kind: input, shape index: {}]
  %s3 = inlined_call_operand.vmem [shape: f32[2,64], index: 3, kind: output, shape index: {}]
  %s4 = sld [smem:[#allocation0]]
  $region22: #{duel_noisy_dqn_forward.6} parent=0
    _
  %s6 = ssub.s32 1, %s4
  %s7 = scalar_select 0, %s6, %s4
  // Predicated region
  $region2: #{duel_noisy_dqn_forward.6} parent=0 // pred_check
    _
  $region3: #{duel_noisy_dqn_forward.6} parent=0 // pred_check_branch
    %9 = sbr.rel (0) target = $region5
  $region4: #{duel_noisy_dqn_forward.6} parent=0 // pred_region
    _
  $region5: #{duel_noisy_dqn_forward.6} parent=0 // pred_fallthru
    _
  // Predicated region
  $region6: #{duel_noisy_dqn_forward.6} parent=0 // pred_check
    _
  $region7: #{duel_noisy_dqn_forward.6} parent=0 // pred_check_branch
    %11 = sbr.rel (0) target = $region9
  $region8: #{duel_noisy_dqn_forward.6} parent=0 // pred_region
    _
  $region9: #{duel_noisy_dqn_forward.6} parent=0 // pred_fallthru
    _
  // Predicated region
  $region10: #{duel_noisy_dqn_forward.6} parent=0 // pred_check
    _
  $region11: #{duel_noisy_dqn_forward.6} parent=0 // pred_check_branch
    %13 = sbr.rel (0) target = $region13
  $region12: #{duel_noisy_dqn_forward.6} parent=0 // pred_region
    _
  $region13: #{duel_noisy_dqn_forward.6} parent=0 // pred_fallthru
    _
  %v14 = vld [vmem:[%s1] sm:$0xff]
  %v15 = vld [vmem:[%s1 + $0x8] sm:$0xff]
  %v16 = vld [vmem:[%s1 + $0x10] sm:$0xff]
  %v17 = vld [vmem:[%s1 + $0x18] sm:$0xff]
  %v18 = vld [vmem:[%s1 + $0x20] sm:$0xff]
  %v19 = vld [vmem:[%s1 + $0x28] sm:$0xff]
  %v20 = vld [vmem:[%s1 + $0x30] sm:$0xff]
  %v21 = vld [vmem:[%s1 + $0x38] sm:$0xff]
  %v22 = vld [vmem:[%s1 + $0x40] sm:$0xff]
  %v23 = vld [vmem:[%s1 + $0x48] sm:$0xff]
  %v24 = vld [vmem:[%s1 + $0x50] sm:$0xff]
  %v25 = vld [vmem:[%s1 + $0x58] sm:$0xff]
  %v26 = vld [vmem:[%s1 + $0x60] sm:$0xff]
  %v27 = vld [vmem:[%s1 + $0x68] sm:$0xff]
  %v28 = vld [vmem:[%s1 + $0x70] sm:$0xff]
  %v29 = vld [vmem:[%s1 + $0x78] sm:$0xff]
  %v30 = vld [vmem:[%s1 + $0x80] sm:$0xff]
  %v31 = vld [vmem:[%s1 + $0x88] sm:$0xff]
  %v32 = vld [vmem:[%s1 + $0x90] sm:$0xff]
  %v33 = vld [vmem:[%s1 + $0x98] sm:$0xff]
  %v34 = vld [vmem:[%s1 + $0xa0] sm:$0xff]
  %v35 = vld [vmem:[%s1 + $0xa8] sm:$0xff]
  %v36 = vld [vmem:[%s1 + $0xb0] sm:$0xff]
  %v37 = vld [vmem:[%s1 + $0xb8] sm:$0xff]
  %v38 = vld [vmem:[%s1 + $0xc0] sm:$0xff]
  %v39 = vld [vmem:[%s1 + $0xc8] sm:$0xff]
  %v40 = vld [vmem:[%s1 + $0xd0] sm:$0xff]
  %v41 = vld [vmem:[%s1 + $0xd8] sm:$0xff]
  %v42 = vld [vmem:[%s1 + $0xe0] sm:$0xff]
  %v43 = vld [vmem:[%s1 + $0xe8] sm:$0xff]
  %v44 = vld [vmem:[%s1 + $0xf0] sm:$0xff]
  %v45 = vld [vmem:[%s1 + $0xf8] sm:$0xff]
  %v46 = vld [vmem:[%s1 + $0x100] sm:$0xff]
  %v47 = vld [vmem:[%s1 + $0x108] sm:$0xff]
  %v48 = vld [vmem:[%s1 + $0x110] sm:$0xff]
  %v49 = vld [vmem:[%s1 + $0x118] sm:$0xff]
  %v50 = vld [vmem:[%s1 + $0x120] sm:$0xff]
  %v51 = vld [vmem:[%s1 + $0x128] sm:$0xff]
  %v52 = vld [vmem:[%s1 + $0x130] sm:$0xff]
  %v53 = vld [vmem:[%s1 + $0x138] sm:$0xff]
  %v54 = vld [vmem:[%s1 + $0x140] sm:$0xff]
  %v55 = vld [vmem:[%s1 + $0x148] sm:$0xff]
  %v56 = vld [vmem:[%s1 + $0x150] sm:$0xff]
  %v57 = vld [vmem:[%s1 + $0x158] sm:$0xff]
  %v58 = vld [vmem:[%s1 + $0x160] sm:$0xff]
  %v59 = vld [vmem:[%s1 + $0x168] sm:$0xff]
  %v60 = vld [vmem:[%s1 + $0x170] sm:$0xff]
  %v61 = vld [vmem:[%s1 + $0x178] sm:$0xff]
  %v62 = vld [vmem:[%s1 + $0x180] sm:$0xff]
  %v63 = vld [vmem:[%s1 + $0x188] sm:$0xff]
  %v64 = vld [vmem:[%s1 + $0x190] sm:$0xff]
  %v65 = vld [vmem:[%s1 + $0x198] sm:$0xff]
  %v66 = vld [vmem:[%s1 + $0x1a0] sm:$0xff]
  %v67 = vld [vmem:[%s1 + $0x1a8] sm:$0xff]
  %v68 = vld [vmem:[%s1 + $0x1b0] sm:$0xff]
  %v69 = vld [vmem:[%s1 + $0x1b8] sm:$0xff]
  %v70 = vld [vmem:[%s1 + $0x1c0] sm:$0xff]
  %v71 = vld [vmem:[%s1 + $0x1c8] sm:$0xff]
  %v72 = vld [vmem:[%s1 + $0x1d0] sm:$0xff]
  %v73 = vld [vmem:[%s1 + $0x1d8] sm:$0xff]
  %v74 = vld [vmem:[%s1 + $0x1e0] sm:$0xff]
  %v75 = vld [vmem:[%s1 + $0x1e8] sm:$0xff]
  %v76 = vld [vmem:[%s1 + $0x1f0] sm:$0xff]
  %v77 = vld [vmem:[%s1 + $0x1f8] sm:$0xff]
  %v78 = vld [vmem:[%s1 + $0x200] sm:$0xff]
  %v79 = vld [vmem:[%s1 + $0x208] sm:$0xff]
  %v80 = vld [vmem:[%s1 + $0x210] sm:$0xff]
  %v81 = vld [vmem:[%s1 + $0x218] sm:$0xff]
  %v82 = vld [vmem:[%s1 + $0x220] sm:$0xff]
  %v83 = vld [vmem:[%s1 + $0x228] sm:$0xff]
  %v84 = vld [vmem:[%s1 + $0x230] sm:$0xff]
  %v85 = vld [vmem:[%s1 + $0x238] sm:$0xff]
  %v86 = vld [vmem:[%s0] sm:$0xff]
  %v87 = vld [vmem:[%s0 + $0x8] sm:$0x3]
  %v88 = vld [vmem:[%s2] sm:$0x1]
  %v90 = vlaneseq
  %v91 = vshrl.u32 %v90, 7
  %v92 = vsub.s32 0, %v91
  %v93 = vrot.slane %v88, %v92
  %v97 = vcombine.high %v86, %v86
  %v99 = vunpack.c.l.s4 1983009808
  %v100 = vunpack.c.0.s8 %v99
  %v101 = vlaneseq
  %v102 = vshrl.u32 %v101, 7
  %v103 = vsub.s32 %v100, %v102
  %v104 = vrot.slane %v86, %v103
  %v106 = vunpack.c.l.s4 1983009808
  %v107 = vunpack.c.0.s8 %v106
  %v108 = vlaneseq
  %v109 = vshrl.u32 %v108, 7
  %v110 = vsub.s32 %v107, %v109
  %v111 = vrot.slane %v97, %v110
  %v112 = vcombine.high %v104, %v104
  %v113 = vcombine.high %v111, %v111
  %v115 = vunpack.c.l.s4 1983009808
  %v116 = vunpack.c.0.s8 %v115
  %v117 = vlaneseq
  %v118 = vshrl.u32 %v117, 7
  %v119 = vsub.s32 %v116, %v118
  %v120 = vrot.slane %v87, %v119
  %vm125 = vcmask 523264
  %v126 = vsel %vm125, %v120, 0
  %128 = vmatprep.subr.mxu0 0.0
  %129 = vmatpush1.msra.mxu0 %v14
  %130 = vmatprep.subr.mxu0 0.0
  %131 = vmatpush1.msra.mxu0 %v15
  %132 = vmatprep.subr.mxu0 0.0
  %133 = vmatpush1.msra.mxu0 %v16
  %134 = vmatprep.subr.mxu0 0.0
  %135 = vmatpush1.msra.mxu0 %v17
  %136 = vmatprep.subr.mxu0 0.0
  %137 = vmatpush1.msra.mxu0 %v18
  %138 = vmatprep.subr.mxu0 0.0
  %139 = vmatpush1.msra.mxu0 %v19
  %140 = vmatprep.subr.mxu0 0.0
  %141 = vmatpush1.msra.mxu0 %v20
  %142 = vmatprep.subr.mxu0 0.0
  %143 = vmatpush1.msra.mxu0 %v21
  %144 = vmatprep.subr.mxu0 0.0
  %145 = vmatpush1.msra.mxu0 %v22
  %146 = vmatprep.subr.mxu0 0.0
  %147 = vmatpush1.msra.mxu0 %v23
  %148 = vmatprep.subr.mxu0 0.0
  %149 = vmatpush1.msra.mxu0 %v24
  %150 = vmatprep.subr.mxu0 0.0
  %151 = vmatpush1.msra.mxu0 %v25
  %152 = vmatprep.subr.mxu0 0.0
  %153 = vmatpush1.msra.mxu0 %v26
  %154 = vmatprep.subr.mxu0 0.0
  %155 = vmatpush1.msra.mxu0 %v27
  %156 = vmatprep.subr.mxu0 0.0
  %157 = vmatpush1.msra.mxu0 %v28
  %158 = vmatprep.subr.mxu0 0.0
  %159 = vmatpush1.msra.mxu0 %v29
  %160 = vmatprep.subr.mxu0 0.0
  %161 = vmatpush1.msra.mxu0 %v30
  %162 = vmatprep.subr.mxu0 0.0
  %163 = vmatpush1.msra.mxu0 %v31
  %164 = vmatprep.subr.mxu0 0.0
  %165 = vmatpush1.msra.mxu0 %v32
  %166 = vmatprep.subr.mxu0 0.0
  %167 = vmatpush1.msra.mxu0 %v33
  %168 = vmatprep.subr.mxu0 0.0
  %169 = vmatpush1.msra.mxu0 %v34
  %170 = vmatprep.subr.mxu0 0.0
  %171 = vmatpush1.msra.mxu0 %v35
  %172 = vmatprep.subr.mxu0 0.0
  %173 = vmatpush1.msra.mxu0 %v36
  %174 = vmatprep.subr.mxu0 0.0
  %175 = vmatpush1.msra.mxu0 %v37
  %176 = vmatprep.subr.mxu0 0.0
  %177 = vmatpush1.msra.mxu0 %v38
  %178 = vmatprep.subr.mxu0 0.0
  %179 = vmatpush1.msra.mxu0 %v39
  %180 = vmatprep.subr.mxu0 0.0
  %181 = vmatpush1.msra.mxu0 %v40
  %182 = vmatprep.subr.mxu0 0.0
  %183 = vmatpush1.msra.mxu0 %v41
  %184 = vmatprep.subr.mxu0 0.0
  %185 = vmatpush1.msra.mxu0 %v42
  %186 = vmatprep.subr.mxu0 0.0
  %187 = vmatpush1.msra.mxu0 %v43
  %188 = vmatprep.subr.mxu0 0.0
  %189 = vmatpush1.msra.mxu0 %v44
  %190 = vmatprep.subr.mxu0 0.0
  %191 = vmatpush1.msra.mxu0 %v45
  %192 = vmatprep.mubr.f32.mxu0 %v112
  %193 = vmatmul.mubr.f32.gmra.mrb[0].mxu0 %v104
  %v194 = vpop.f32.mrb[0].mxu0
  %v195 = vadd.f32 %v93, %v194
  %v196 = vpop.f32.mrb[0].mxu0
  %197 = vdwg.mxu0
  %198 = vmatprep.subr.mxu0 0.0
  %199 = vmatpush1.msra.mxu0 %v46
  %200 = vmatprep.subr.mxu0 0.0
  %201 = vmatpush1.msra.mxu0 %v47
  %202 = vmatprep.subr.mxu0 0.0
  %203 = vmatpush1.msra.mxu0 %v48
  %204 = vmatprep.subr.mxu0 0.0
  %205 = vmatpush1.msra.mxu0 %v49
  %206 = vmatprep.subr.mxu0 0.0
  %207 = vmatpush1.msra.mxu0 %v50
  %208 = vmatprep.subr.mxu0 0.0
  %209 = vmatpush1.msra.mxu0 %v51
  %210 = vmatprep.subr.mxu0 0.0
  %211 = vmatpush1.msra.mxu0 %v52
  %212 = vmatprep.subr.mxu0 0.0
  %213 = vmatpush1.msra.mxu0 %v53
  %214 = vmatprep.subr.mxu0 0.0
  %215 = vmatpush1.msra.mxu0 %v54
  %216 = vmatprep.subr.mxu0 0.0
  %217 = vmatpush1.msra.mxu0 %v55
  %218 = vmatprep.subr.mxu0 0.0
  %219 = vmatpush1.msra.mxu0 %v56
  %220 = vmatprep.subr.mxu0 0.0
  %221 = vmatpush1.msra.mxu0 %v57
  %222 = vmatprep.subr.mxu0 0.0
  %223 = vmatpush1.msra.mxu0 %v58
  %224 = vmatprep.subr.mxu0 0.0
  %225 = vmatpush1.msra.mxu0 %v59
  %226 = vmatprep.subr.mxu0 0.0
  %227 = vmatpush1.msra.mxu0 %v60
  %228 = vmatprep.subr.mxu0 0.0
  %229 = vmatpush1.msra.mxu0 %v61
  %230 = vmatprep.subr.mxu0 0.0
  %231 = vmatpush1.msra.mxu0 %v62
  %232 = vmatprep.subr.mxu0 0.0
  %233 = vmatpush1.msra.mxu0 %v63
  %234 = vmatprep.subr.mxu0 0.0
  %235 = vmatpush1.msra.mxu0 %v64
  %236 = vmatprep.subr.mxu0 0.0
  %237 = vmatpush1.msra.mxu0 %v65
  %238 = vmatprep.subr.mxu0 0.0
  %239 = vmatpush1.msra.mxu0 %v66
  %240 = vmatprep.subr.mxu0 0.0
  %241 = vmatpush1.msra.mxu0 %v67
  %242 = vmatprep.subr.mxu0 0.0
  %243 = vmatpush1.msra.mxu0 %v68
  %244 = vmatprep.subr.mxu0 0.0
  %245 = vmatpush1.msra.mxu0 %v69
  %246 = vmatprep.subr.mxu0 0.0
  %247 = vmatpush1.msra.mxu0 %v70
  %248 = vmatprep.subr.mxu0 0.0
  %249 = vmatpush1.msra.mxu0 %v71
  %250 = vmatprep.subr.mxu0 0.0
  %251 = vmatpush1.msra.mxu0 %v72
  %252 = vmatprep.subr.mxu0 0.0
  %253 = vmatpush1.msra.mxu0 %v73
  %254 = vmatprep.subr.mxu0 0.0
  %255 = vmatpush1.msra.mxu0 %v74
  %256 = vmatprep.subr.mxu0 0.0
  %257 = vmatpush1.msra.mxu0 %v75
  %258 = vmatprep.subr.mxu0 0.0
  %259 = vmatpush1.msra.mxu0 %v76
  %260 = vmatprep.subr.mxu0 0.0
  %261 = vmatpush1.msra.mxu0 %v77
  %262 = vmatprep.mubr.f32.mxu0 %v113
  %263 = vmatmul.mubr.f32.gmra.mrb[0].mxu0 %v111
  %v264 = vpop.f32.mrb[0].mxu0
  %v265 = vadd.f32 %v195, %v264
  %v266 = vpop.f32.mrb[0].mxu0
  %267 = vdwg.mxu0
  %268 = vmatprep.subr.mxu0 0.0
  %269 = vmatpush1.msra.mxu0 %v78
  %270 = vmatprep.subr.mxu0 0.0
  %271 = vmatpush1.msra.mxu0 %v79
  %272 = vmatprep.subr.mxu0 0.0
  %273 = vmatpush1.msra.mxu0 %v80
  %274 = vmatprep.subr.mxu0 0.0
  %275 = vmatpush1.msra.mxu0 %v81
  %276 = vmatprep.subr.mxu0 0.0
  %277 = vmatpush1.msra.mxu0 %v82
  %278 = vmatprep.subr.mxu0 0.0
  %279 = vmatpush1.msra.mxu0 %v83
  %280 = vmatprep.subr.mxu0 0.0
  %281 = vmatpush1.msra.mxu0 %v84
  %282 = vmatprep.subr.mxu0 0.0
  %283 = vmatpush1.msra.mxu0 %v85
  %284 = vmatprep.subr.mxu0 0.0
  %285 = vmatpush1.msra.mxu0 0.0
  %286 = vmatprep.subr.mxu0 0.0
  %287 = vmatpush1.msra.mxu0 0.0
  %288 = vmatprep.subr.mxu0 0.0
  %289 = vmatpush1.msra.mxu0 0.0
  %290 = vmatprep.subr.mxu0 0.0
  %291 = vmatpush1.msra.mxu0 0.0
  %292 = vmatprep.subr.mxu0 0.0
  %293 = vmatpush1.msra.mxu0 0.0
  %294 = vmatprep.subr.mxu0 0.0
  %295 = vmatpush1.msra.mxu0 0.0
  %296 = vmatprep.subr.mxu0 0.0
  %297 = vmatpush1.msra.mxu0 0.0
  %298 = vmatprep.subr.mxu0 0.0
  %299 = vmatpush1.msra.mxu0 0.0
  %300 = vmatprep.subr.mxu0 0.0
  %301 = vmatpush1.msra.mxu0 0.0
  %302 = vmatprep.subr.mxu0 0.0
  %303 = vmatpush1.msra.mxu0 0.0
  %304 = vmatprep.subr.mxu0 0.0
  %305 = vmatpush1.msra.mxu0 0.0
  %306 = vmatprep.subr.mxu0 0.0
  %307 = vmatpush1.msra.mxu0 0.0
  %308 = vmatprep.subr.mxu0 0.0
  %309 = vmatpush1.msra.mxu0 0.0
  %310 = vmatprep.subr.mxu0 0.0
  %311 = vmatpush1.msra.mxu0 0.0
  %312 = vmatprep.subr.mxu0 0.0
  %313 = vmatpush1.msra.mxu0 0.0
  %314 = vmatprep.subr.mxu0 0.0
  %315 = vmatpush1.msra.mxu0 0.0
  %316 = vmatprep.subr.mxu0 0.0
  %317 = vmatpush1.msra.mxu0 0.0
  %318 = vmatprep.subr.mxu0 0.0
  %319 = vmatpush1.msra.mxu0 0.0
  %320 = vmatprep.subr.mxu0 0.0
  %321 = vmatpush1.msra.mxu0 0.0
  %322 = vmatprep.subr.mxu0 0.0
  %323 = vmatpush1.msra.mxu0 0.0
  %324 = vmatprep.subr.mxu0 0.0
  %325 = vmatpush1.msra.mxu0 0.0
  %326 = vmatprep.subr.mxu0 0.0
  %327 = vmatpush1.msra.mxu0 0.0
  %328 = vmatprep.subr.mxu0 0.0
  %329 = vmatpush1.msra.mxu0 0.0
  %330 = vmatprep.subr.mxu0 0.0
  %331 = vmatpush1.msra.mxu0 0.0
  %332 = vmatprep.mubr.f32.mxu0 0.0
  %333 = vmatmul.mubr.f32.gmra.mrb[0].mxu0 %v126
  %v334 = vpop.f32.mrb[0].mxu0
  %v335 = vadd.f32 %v265, %v334
  %v336 = vpop.f32.mrb[0].mxu0
  %337 = vdwg.mxu0
  %v338 = vmax.f32 %v335, 0.0
  %vm339 = vcmask 517120
  %340 = vst.msk [vmem:[%s3] sm:$0x3] %vm339, %v338
  // Predicated region
  $region14: #{duel_noisy_dqn_forward.6} parent=0 // pred_check
    _
  $region15: #{duel_noisy_dqn_forward.6} parent=0 // pred_check_branch
    %342 = sbr.rel (0) target = $region17
  $region16: #{duel_noisy_dqn_forward.6} parent=0 // pred_region
    _
  $region17: #{duel_noisy_dqn_forward.6} parent=0 // pred_fallthru
    _
  // Predicated region
  $region18: #{duel_noisy_dqn_forward.6} parent=0 // pred_check
    _
  $region19: #{duel_noisy_dqn_forward.6} parent=0 // pred_check_branch
    %344 = sbr.rel (0) target = $region21
  $region20: #{duel_noisy_dqn_forward.6} parent=0 // pred_region
    _
  $region21: #{duel_noisy_dqn_forward.6} parent=0 // pred_fallthru
    _

// kernel: duel_noisy_dqn_forward.7
$region0: #{duel_noisy_dqn_forward.7}
  #allocation0 [shape = 'u32[]', space=smem, size = 0x4, offset = 0x4, fixed_abs, tag = 'smem constant byte address 0x4 - core index']
  #allocation1 [shape = 'u32[144,128]{1,0:T(1,128)}', space=vmem, size = 0x12000, scoped, tag = 'internal scratch']
  %s0 = inlined_call_operand.vmem [shape: f32[2,64], index: 0, kind: input, shape index: {}]
  %s1 = inlined_call_operand.vmem [shape: f32[64,512], index: 1, kind: input, shape index: {}]
  %s2 = inlined_call_operand.vmem [shape: f32[1,512], index: 2, kind: input, shape index: {}]
  %s3 = inlined_call_operand.vmem [shape: f32[512,128], index: 3, kind: input, shape index: {}]
  %s4 = inlined_call_operand.vmem [shape: f32[1,128], index: 4, kind: input, shape index: {}]
  %s5 = inlined_call_operand.hbm [shape: f32[2,6], index: 5, kind: output, shape index: {}]
  %s6 = sld [smem:[#allocation0]]
  $region30: #{duel_noisy_dqn_forward.7} parent=0
    _
  %s8 = ssub.s32 1, %s6
  %s9 = scalar_select 0, %s8, %s6
  $region1: #{duel_noisy_dqn_forward.7} parent=0
    #allocation2 [shape = 'u8[1024]{0}', space=vmem, size = 0x400, scoped, tag = 'output window, operand 0, single buffered']
    #allocation3 [shape = 's32[1]{0}', space=sflag, size = 0x4, scoped, tag = 'scoped memory for duel_noisy_dqn_forward.7']
    %10 = vsyncpa [#allocation3], 0
    // Predicated region
    $region2: #{duel_noisy_dqn_forward.7} parent=1 // pred_check
      _
    $region3: #{duel_noisy_dqn_forward.7} parent=1 // pred_check_branch
      %12 = sbr.rel (0) target = $region5
    $region4: #{duel_noisy_dqn_forward.7} parent=1 // pred_region
      _
    $region5: #{duel_noisy_dqn_forward.7} parent=1 // pred_fallthru
      _
    // Predicated region
    $region6: #{duel_noisy_dqn_forward.7} parent=1 // pred_check
      _
    $region7: #{duel_noisy_dqn_forward.7} parent=1 // pred_check_branch
      %14 = sbr.rel (0) target = $region9
    $region8: #{duel_noisy_dqn_forward.7} parent=1 // pred_region
      _
    $region9: #{duel_noisy_dqn_forward.7} parent=1 // pred_fallthru
      _
    // Predicated region
    $region10: #{duel_noisy_dqn_forward.7} parent=1 // pred_check
      _
    $region11: #{duel_noisy_dqn_forward.7} parent=1 // pred_check_branch
      %16 = sbr.rel (0) target = $region13
    $region12: #{duel_noisy_dqn_forward.7} parent=1 // pred_region
      _
    $region13: #{duel_noisy_dqn_forward.7} parent=1 // pred_fallthru
      _
    // Predicated region
    $region14: #{duel_noisy_dqn_forward.7} parent=1 // pred_check
      _
    $region15: #{duel_noisy_dqn_forward.7} parent=1 // pred_check_branch
      %18 = sbr.rel (0) target = $region17
    $region16: #{duel_noisy_dqn_forward.7} parent=1 // pred_region
      _
    $region17: #{duel_noisy_dqn_forward.7} parent=1 // pred_fallthru
      _
    // Predicated region
    $region18: #{duel_noisy_dqn_forward.7} parent=1 // pred_check
      _
    $region19: #{duel_noisy_dqn_forward.7} parent=1 // pred_check_branch
      %20 = sbr.rel (0) target = $region21
    $region20: #{duel_noisy_dqn_forward.7} parent=1 // pred_region
      _
    $region21: #{duel_noisy_dqn_forward.7} parent=1 // pred_fallthru
      _
    %v21 = vld [vmem:[%s0] sm:$0x3]
    %v22 = vld [vmem:[%s1] sm:$0xff]
    %v23 = vld [vmem:[%s1 + $0x8] sm:$0xff]
    %v24 = vld [vmem:[%s1 + $0x10] sm:$0xff]
    %v25 = vld [vmem:[%s1 + $0x18] sm:$0xff]
    %v26 = vld [vmem:[%s1 + $0x20] sm:$0xff]
    %v27 = vld [vmem:[%s1 + $0x28] sm:$0xff]
    %v28 = vld [vmem:[%s1 + $0x30] sm:$0xff]
    %v29 = vld [vmem:[%s1 + $0x38] sm:$0xff]
    %v30 = vld [vmem:[%s1 + $0x40] sm:$0xff]
    %v31 = vld [vmem:[%s1 + $0x48] sm:$0xff]
    %v32 = vld [vmem:[%s1 + $0x50] sm:$0xff]
    %v33 = vld [vmem:[%s1 + $0x58] sm:$0xff]
    %v34 = vld [vmem:[%s1 + $0x60] sm:$0xff]
    %v35 = vld [vmem:[%s1 + $0x68] sm:$0xff]
    %v36 = vld [vmem:[%s1 + $0x70] sm:$0xff]
    %v37 = vld [vmem:[%s1 + $0x78] sm:$0xff]
    %v38 = vld [vmem:[%s1 + $0x80] sm:$0xff]
    %v39 = vld [vmem:[%s1 + $0x88] sm:$0xff]
    %v40 = vld [vmem:[%s1 + $0x90] sm:$0xff]
    %v41 = vld [vmem:[%s1 + $0x98] sm:$0xff]
    %v42 = vld [vmem:[%s1 + $0xa0] sm:$0xff]
    %v43 = vld [vmem:[%s1 + $0xa8] sm:$0xff]
    %v44 = vld [vmem:[%s1 + $0xb0] sm:$0xff]
    %v45 = vld [vmem:[%s1 + $0xb8] sm:$0xff]
    %v46 = vld [vmem:[%s1 + $0xc0] sm:$0xff]
    %v47 = vld [vmem:[%s1 + $0xc8] sm:$0xff]
    %v48 = vld [vmem:[%s1 + $0xd0] sm:$0xff]
    %v49 = vld [vmem:[%s1 + $0xd8] sm:$0xff]
    %v50 = vld [vmem:[%s1 + $0xe0] sm:$0xff]
    %v51 = vld [vmem:[%s1 + $0xe8] sm:$0xff]
    %v52 = vld [vmem:[%s1 + $0xf0] sm:$0xff]
    %v53 = vld [vmem:[%s1 + $0xf8] sm:$0xff]
    %v54 = vld [vmem:[%s2] sm:$0xf]
    %v56 = vlaneseq
    %v57 = vshrl.u32 %v56, 7
    %v58 = vsub.s32 0, %v57
    %v59 = vrot.slane %v54, %v58
    %v60 = vlaneseq
    %v61 = vshrl.u32 %v60, 7
    %v62 = vsub.s32 1, %v61
    %v63 = vrot.slane %v54, %v62
    %v64 = vlaneseq
    %v65 = vshrl.u32 %v64, 7
    %v66 = vsub.s32 2, %v65
    %v67 = vrot.slane %v54, %v66
    %v68 = vlaneseq
    %v69 = vshrl.u32 %v68, 7
    %v70 = vsub.s32 3, %v69
    %v71 = vrot.slane %v54, %v70
    %vm76 = vcmask 523264
    %v78 = vsel %vm76, %v21, 0
    %80 = vmatprep.subr.mxu0 %v23
    %81 = vmatpush1.msra.mxu0 %v22
    %82 = vmatprep.subr.mxu0 %v27
    %83 = vmatpush1.msra.mxu0 %v26
    %84 = vmatprep.subr.mxu0 %v31
    %85 = vmatpush1.msra.mxu0 %v30
    %86 = vmatprep.subr.mxu0 %v35
    %87 = vmatpush1.msra.mxu0 %v34
    %88 = vmatprep.subr.mxu0 %v39
    %89 = vmatpush1.msra.mxu0 %v38
    %90 = vmatprep.subr.mxu0 %v43
    %91 = vmatpush1.msra.mxu0 %v42
    %92 = vmatprep.subr.mxu0 %v47
    %93 = vmatpush1.msra.mxu0 %v46
    %94 = vmatprep.subr.mxu0 %v51
    %95 = vmatpush1.msra.mxu0 %v50
    %96 = vmatprep.subr.mxu0 0.0
    %97 = vmatpush1.msra.mxu0 0.0
    %98 = vmatprep.subr.mxu0 0.0
    %99 = vmatpush1.msra.mxu0 0.0
    %100 = vmatprep.subr.mxu0 0.0
    %101 = vmatpush1.msra.mxu0 0.0
    %102 = vmatprep.subr.mxu0 0.0
    %103 = vmatpush1.msra.mxu0 0.0
    %104 = vmatprep.subr.mxu0 0.0
    %105 = vmatpush1.msra.mxu0 0.0
    %106 = vmatprep.subr.mxu0 0.0
    %107 = vmatpush1.msra.mxu0 0.0
    %108 = vmatprep.subr.mxu0 0.0
    %109 = vmatpush1.msra.mxu0 0.0
    %110 = vmatprep.subr.mxu0 0.0
    %111 = vmatpush1.msra.mxu0 0.0
    %112 = vmatprep.subr.mxu0 0.0
    %113 = vmatpush1.msra.mxu0 0.0
    %114 = vmatprep.subr.mxu0 0.0
    %115 = vmatpush1.msra.mxu0 0.0
    %116 = vmatprep.subr.mxu0 0.0
    %117 = vmatpush1.msra.mxu0 0.0
    %118 = vmatprep.subr.mxu0 0.0
    %119 = vmatpush1.msra.mxu0 0.0
    %120 = vmatprep.subr.mxu0 0.0
    %121 = vmatpush1.msra.mxu0 0.0
    %122 = vmatprep.subr.mxu0 0.0
    %123 = vmatpush1.msra.mxu0 0.0
    %124 = vmatprep.subr.mxu0 0.0
    %125 = vmatpush1.msra.mxu0 0.0
    %126 = vmatprep.subr.mxu0 0.0
    %127 = vmatpush1.msra.mxu0 0.0
    %128 = vmatprep.subr.mxu0 0.0
    %129 = vmatpush1.msra.mxu0 0.0
    %130 = vmatprep.subr.mxu0 0.0
    %131 = vmatpush1.msra.mxu0 0.0
    %132 = vmatprep.subr.mxu0 0.0
    %133 = vmatpush1.msra.mxu0 0.0
    %134 = vmatprep.subr.mxu0 0.0
    %135 = vmatpush1.msra.mxu0 0.0
    %136 = vmatprep.subr.mxu0 0.0
    %137 = vmatpush1.msra.mxu0 0.0
    %138 = vmatprep.subr.mxu0 0.0
    %139 = vmatpush1.msra.mxu0 0.0
    %140 = vmatprep.subr.mxu0 0.0
    %141 = vmatpush1.msra.mxu0 0.0
    %142 = vmatprep.subr.mxu0 0.0
    %143 = vmatpush1.msra.mxu0 0.0
    %144 = vmatprep.mubr.f32.mxu0 0.0
    %145 = vmatmul.mubr.f32.gmra.mrb[0].mxu0 %v78
    %v146 = vpop.f32.mrb[0].mxu0
    %v147 = vadd.f32 %v59, %v146
    %v148 = vpop.f32.mrb[0].mxu0
    %v149 = vadd.f32 %v63, %v148
    %150 = vdwg.mxu0
    %151 = vmatprep.subr.mxu0 %v25
    %152 = vmatpush1.msra.mxu0 %v24
    %153 = vmatprep.subr.mxu0 %v29
    %154 = vmatpush1.msra.mxu0 %v28
    %155 = vmatprep.subr.mxu0 %v33
    %156 = vmatpush1.msra.mxu0 %v32
    %157 = vmatprep.subr.mxu0 %v37
    %158 = vmatpush1.msra.mxu0 %v36
    %159 = vmatprep.subr.mxu0 %v41
    %160 = vmatpush1.msra.mxu0 %v40
    %161 = vmatprep.subr.mxu0 %v45
    %162 = vmatpush1.msra.mxu0 %v44
    %163 = vmatprep.subr.mxu0 %v49
    %164 = vmatpush1.msra.mxu0 %v48
    %165 = vmatprep.subr.mxu0 %v53
    %166 = vmatpush1.msra.mxu0 %v52
    %167 = vmatprep.subr.mxu0 0.0
    %168 = vmatpush1.msra.mxu0 0.0
    %169 = vmatprep.subr.mxu0 0.0
    %170 = vmatpush1.msra.mxu0 0.0
    %171 = vmatprep.subr.mxu0 0.0
    %172 = vmatpush1.msra.mxu0 0.0
    %173 = vmatprep.subr.mxu0 0.0
    %174 = vmatpush1.msra.mxu0 0.0
    %175 = vmatprep.subr.mxu0 0.0
    %176 = vmatpush1.msra.mxu0 0.0
    %177 = vmatprep.subr.mxu0 0.0
    %178 = vmatpush1.msra.mxu0 0.0
    %179 = vmatprep.subr.mxu0 0.0
    %180 = vmatpush1.msra.mxu0 0.0
    %181 = vmatprep.subr.mxu0 0.0
    %182 = vmatpush1.msra.mxu0 0.0
    %183 = vmatprep.subr.mxu0 0.0
    %184 = vmatpush1.msra.mxu0 0.0
    %185 = vmatprep.subr.mxu0 0.0
    %186 = vmatpush1.msra.mxu0 0.0
    %187 = vmatprep.subr.mxu0 0.0
    %188 = vmatpush1.msra.mxu0 0.0
    %189 = vmatprep.subr.mxu0 0.0
    %190 = vmatpush1.msra.mxu0 0.0
    %191 = vmatprep.subr.mxu0 0.0
    %192 = vmatpush1.msra.mxu0 0.0
    %193 = vmatprep.subr.mxu0 0.0
    %194 = vmatpush1.msra.mxu0 0.0
    %195 = vmatprep.subr.mxu0 0.0
    %196 = vmatpush1.msra.mxu0 0.0
    %197 = vmatprep.subr.mxu0 0.0
    %198 = vmatpush1.msra.mxu0 0.0
    %199 = vmatprep.subr.mxu0 0.0
    %200 = vmatpush1.msra.mxu0 0.0
    %201 = vmatprep.subr.mxu0 0.0
    %202 = vmatpush1.msra.mxu0 0.0
    %203 = vmatprep.subr.mxu0 0.0
    %204 = vmatpush1.msra.mxu0 0.0
    %205 = vmatprep.subr.mxu0 0.0
    %206 = vmatpush1.msra.mxu0 0.0
    %207 = vmatprep.subr.mxu0 0.0
    %208 = vmatpush1.msra.mxu0 0.0
    %209 = vmatprep.subr.mxu0 0.0
    %210 = vmatpush1.msra.mxu0 0.0
    %211 = vmatprep.subr.mxu0 0.0
    %212 = vmatpush1.msra.mxu0 0.0
    %213 = vmatprep.subr.mxu0 0.0
    %214 = vmatpush1.msra.mxu0 0.0
    %215 = vmatprep.mubr.f32.mxu0 0.0
    %216 = vmatmul.mubr.f32.gmra.mrb[0].mxu0 %v78
    %v217 = vpop.f32.mrb[0].mxu0
    %v218 = vadd.f32 %v67, %v217
    %v219 = vpop.f32.mrb[0].mxu0
    %v220 = vadd.f32 %v71, %v219
    %221 = vdwg.mxu0
    %v222 = vmax.f32 %v147, 0.0
    %v223 = vmax.f32 %v149, 0.0
    %v224 = vmax.f32 %v218, 0.0
    %v225 = vmax.f32 %v220, 0.0
    %v226 = vld [vmem:[%s3] sm:$0xff]
    %v227 = vld [vmem:[%s3 + $0x8] sm:$0xff]
    %v228 = vld [vmem:[%s3 + $0x10] sm:$0xff]
    %v229 = vld [vmem:[%s3 + $0x18] sm:$0xff]
    %v230 = vld [vmem:[%s3 + $0x20] sm:$0xff]
    %v231 = vld [vmem:[%s3 + $0x28] sm:$0xff]
    %v232 = vld [vmem:[%s3 + $0x30] sm:$0xff]
    %v233 = vld [vmem:[%s3 + $0x38] sm:$0xff]
    %v234 = vld [vmem:[%s3 + $0x40] sm:$0xff]
    %v235 = vld [vmem:[%s3 + $0x48] sm:$0xff]
    %v236 = vld [vmem:[%s3 + $0x50] sm:$0xff]
    %v237 = vld [vmem:[%s3 + $0x58] sm:$0xff]
    %v238 = vld [vmem:[%s3 + $0x60] sm:$0xff]
    %v239 = vld [vmem:[%s3 + $0x68] sm:$0xff]
    %v240 = vld [vmem:[%s3 + $0x70] sm:$0xff]
    %v241 = vld [vmem:[%s3 + $0x78] sm:$0xff]
    %v242 = vld [vmem:[%s3 + $0x80] sm:$0xff]
    %v243 = vld [vmem:[%s3 + $0x88] sm:$0xff]
    %v244 = vld [vmem:[%s3 + $0x90] sm:$0xff]
    %v245 = vld [vmem:[%s3 + $0x98] sm:$0xff]
    %v246 = vld [vmem:[%s3 + $0xa0] sm:$0xff]
    %v247 = vld [vmem:[%s3 + $0xa8] sm:$0xff]
    %v248 = vld [vmem:[%s3 + $0xb0] sm:$0xff]
    %v249 = vld [vmem:[%s3 + $0xb8] sm:$0xff]
    %v250 = vld [vmem:[%s3 + $0xc0] sm:$0xff]
    %v251 = vld [vmem:[%s3 + $0xc8] sm:$0xff]
    %v252 = vld [vmem:[%s3 + $0xd0] sm:$0xff]
    %v253 = vld [vmem:[%s3 + $0xd8] sm:$0xff]
    %v254 = vld [vmem:[%s3 + $0xe0] sm:$0xff]
    %v255 = vld [vmem:[%s3 + $0xe8] sm:$0xff]
    %v256 = vld [vmem:[%s3 + $0xf0] sm:$0xff]
    %v257 = vld [vmem:[%s3 + $0xf8] sm:$0xff]
    %v258 = vld [vmem:[%s3 + $0x100] sm:$0xff]
    %v259 = vld [vmem:[%s3 + $0x108] sm:$0xff]
    %v260 = vld [vmem:[%s3 + $0x110] sm:$0xff]
    %v261 = vld [vmem:[%s3 + $0x118] sm:$0xff]
    %v262 = vld [vmem:[%s3 + $0x120] sm:$0xff]
    %v263 = vld [vmem:[%s3 + $0x128] sm:$0xff]
    %v264 = vld [vmem:[%s3 + $0x130] sm:$0xff]
    %v265 = vld [vmem:[%s3 + $0x138] sm:$0xff]
    %v266 = vld [vmem:[%s3 + $0x140] sm:$0xff]
    %v267 = vld [vmem:[%s3 + $0x148] sm:$0xff]
    %v268 = vld [vmem:[%s3 + $0x150] sm:$0xff]
    %v269 = vld [vmem:[%s3 + $0x158] sm:$0xff]
    %v270 = vld [vmem:[%s3 + $0x160] sm:$0xff]
    %v271 = vld [vmem:[%s3 + $0x168] sm:$0xff]
    %v272 = vld [vmem:[%s3 + $0x170] sm:$0xff]
    %v273 = vld [vmem:[%s3 + $0x178] sm:$0xff]
    %v274 = vld [vmem:[%s3 + $0x180] sm:$0xff]
    %v275 = vld [vmem:[%s3 + $0x188] sm:$0xff]
    %v276 = vld [vmem:[%s3 + $0x190] sm:$0xff]
    %v277 = vld [vmem:[%s3 + $0x198] sm:$0xff]
    %v278 = vld [vmem:[%s3 + $0x1a0] sm:$0xff]
    %v279 = vld [vmem:[%s3 + $0x1a8] sm:$0xff]
    %v280 = vld [vmem:[%s3 + $0x1b0] sm:$0xff]
    %v281 = vld [vmem:[%s3 + $0x1b8] sm:$0xff]
    %v282 = vld [vmem:[%s3 + $0x1c0] sm:$0xff]
    %v283 = vld [vmem:[%s3 + $0x1c8] sm:$0xff]
    %v284 = vld [vmem:[%s3 + $0x1d0] sm:$0xff]
    %v285 = vld [vmem:[%s3 + $0x1d8] sm:$0xff]
    %v286 = vld [vmem:[%s3 + $0x1e0] sm:$0xff]
    %v287 = vld [vmem:[%s3 + $0x1e8] sm:$0xff]
    %v288 = vld [vmem:[%s3 + $0x1f0] sm:$0xff]
    %v289 = vld [vmem:[%s3 + $0x1f8] sm:$0xff]
    %v290 = vld [vmem:[%s4] sm:$0x1]
    %v292 = vlaneseq
    %v293 = vshrl.u32 %v292, 7
    %v294 = vsub.s32 0, %v293
    %v295 = vrot.slane %v290, %v294
    %297 = vmatprep.subr.mxu0 0.0
    %298 = vmatpush1.msra.mxu0 %v226
    %299 = vmatprep.subr.mxu0 0.0
    %300 = vmatpush1.msra.mxu0 %v227
    %301 = vmatprep.subr.mxu0 0.0
    %302 = vmatpush1.msra.mxu0 %v228
    %303 = vmatprep.subr.mxu0 0.0
    %304 = vmatpush1.msra.mxu0 %v229
    %305 = vmatprep.subr.mxu0 0.0
    %306 = vmatpush1.msra.mxu0 %v230
    %307 = vmatprep.subr.mxu0 0.0
    %308 = vmatpush1.msra.mxu0 %v231
    %309 = vmatprep.subr.mxu0 0.0
    %310 = vmatpush1.msra.mxu0 %v232
    %311 = vmatprep.subr.mxu0 0.0
    %312 = vmatpush1.msra.mxu0 %v233
    %313 = vmatprep.subr.mxu0 0.0
    %314 = vmatpush1.msra.mxu0 %v234
    %315 = vmatprep.subr.mxu0 0.0
    %316 = vmatpush1.msra.mxu0 %v235
    %317 = vmatprep.subr.mxu0 0.0
    %318 = vmatpush1.msra.mxu0 %v236
    %319 = vmatprep.subr.mxu0 0.0
    %320 = vmatpush1.msra.mxu0 %v237
    %321 = vmatprep.subr.mxu0 0.0
    %322 = vmatpush1.msra.mxu0 %v238
    %323 = vmatprep.subr.mxu0 0.0
    %324 = vmatpush1.msra.mxu0 %v239
    %325 = vmatprep.subr.mxu0 0.0
    %326 = vmatpush1.msra.mxu0 %v240
    %327 = vmatprep.subr.mxu0 0.0
    %328 = vmatpush1.msra.mxu0 %v241
    %329 = vmatprep.subr.mxu0 0.0
    %330 = vmatpush1.msra.mxu0 %v242
    %331 = vmatprep.subr.mxu0 0.0
    %332 = vmatpush1.msra.mxu0 %v243
    %333 = vmatprep.subr.mxu0 0.0
    %334 = vmatpush1.msra.mxu0 %v244
    %335 = vmatprep.subr.mxu0 0.0
    %336 = vmatpush1.msra.mxu0 %v245
    %337 = vmatprep.subr.mxu0 0.0
    %338 = vmatpush1.msra.mxu0 %v246
    %339 = vmatprep.subr.mxu0 0.0
    %340 = vmatpush1.msra.mxu0 %v247
    %341 = vmatprep.subr.mxu0 0.0
    %342 = vmatpush1.msra.mxu0 %v248
    %343 = vmatprep.subr.mxu0 0.0
    %344 = vmatpush1.msra.mxu0 %v249
    %345 = vmatprep.subr.mxu0 0.0
    %346 = vmatpush1.msra.mxu0 %v250
    %347 = vmatprep.subr.mxu0 0.0
    %348 = vmatpush1.msra.mxu0 %v251
    %349 = vmatprep.subr.mxu0 0.0
    %350 = vmatpush1.msra.mxu0 %v252
    %351 = vmatprep.subr.mxu0 0.0
    %352 = vmatpush1.msra.mxu0 %v253
    %353 = vmatprep.subr.mxu0 0.0
    %354 = vmatpush1.msra.mxu0 %v254
    %355 = vmatprep.subr.mxu0 0.0
    %356 = vmatpush1.msra.mxu0 %v255
    %357 = vmatprep.subr.mxu0 0.0
    %358 = vmatpush1.msra.mxu0 %v256
    %359 = vmatprep.subr.mxu0 0.0
    %360 = vmatpush1.msra.mxu0 %v257
    %361 = vmatprep.mubr.f32.mxu0 %v223
    %362 = vmatmul.mubr.f32.gmra.mrb[0].mxu0 %v222
    %v363 = vpop.f32.mrb[0].mxu0
    %v364 = vadd.f32 %v295, %v363
    %v365 = vpop.f32.mrb[0].mxu0
    %366 = vdwg.mxu0
    %367 = vmatprep.subr.mxu0 0.0
    %368 = vmatpush1.msra.mxu0 %v258
    %369 = vmatprep.subr.mxu0 0.0
    %370 = vmatpush1.msra.mxu0 %v259
    %371 = vmatprep.subr.mxu0 0.0
    %372 = vmatpush1.msra.mxu0 %v260
    %373 = vmatprep.subr.mxu0 0.0
    %374 = vmatpush1.msra.mxu0 %v261
    %375 = vmatprep.subr.mxu0 0.0
    %376 = vmatpush1.msra.mxu0 %v262
    %377 = vmatprep.subr.mxu0 0.0
    %378 = vmatpush1.msra.mxu0 %v263
    %379 = vmatprep.subr.mxu0 0.0
    %380 = vmatpush1.msra.mxu0 %v264
    %381 = vmatprep.subr.mxu0 0.0
    %382 = vmatpush1.msra.mxu0 %v265
    %383 = vmatprep.subr.mxu0 0.0
    %384 = vmatpush1.msra.mxu0 %v266
    %385 = vmatprep.subr.mxu0 0.0
    %386 = vmatpush1.msra.mxu0 %v267
    %387 = vmatprep.subr.mxu0 0.0
    %388 = vmatpush1.msra.mxu0 %v268
    %389 = vmatprep.subr.mxu0 0.0
    %390 = vmatpush1.msra.mxu0 %v269
    %391 = vmatprep.subr.mxu0 0.0
    %392 = vmatpush1.msra.mxu0 %v270
    %393 = vmatprep.subr.mxu0 0.0
    %394 = vmatpush1.msra.mxu0 %v271
    %395 = vmatprep.subr.mxu0 0.0
    %396 = vmatpush1.msra.mxu0 %v272
    %397 = vmatprep.subr.mxu0 0.0
    %398 = vmatpush1.msra.mxu0 %v273
    %399 = vmatprep.subr.mxu0 0.0
    %400 = vmatpush1.msra.mxu0 %v274
    %401 = vmatprep.subr.mxu0 0.0
    %402 = vmatpush1.msra.mxu0 %v275
    %403 = vmatprep.subr.mxu0 0.0
    %404 = vmatpush1.msra.mxu0 %v276
    %405 = vmatprep.subr.mxu0 0.0
    %406 = vmatpush1.msra.mxu0 %v277
    %407 = vmatprep.subr.mxu0 0.0
    %408 = vmatpush1.msra.mxu0 %v278
    %409 = vmatprep.subr.mxu0 0.0
    %410 = vmatpush1.msra.mxu0 %v279
    %411 = vmatprep.subr.mxu0 0.0
    %412 = vmatpush1.msra.mxu0 %v280
    %413 = vmatprep.subr.mxu0 0.0
    %414 = vmatpush1.msra.mxu0 %v281
    %415 = vmatprep.subr.mxu0 0.0
    %416 = vmatpush1.msra.mxu0 %v282
    %417 = vmatprep.subr.mxu0 0.0
    %418 = vmatpush1.msra.mxu0 %v283
    %419 = vmatprep.subr.mxu0 0.0
    %420 = vmatpush1.msra.mxu0 %v284
    %421 = vmatprep.subr.mxu0 0.0
    %422 = vmatpush1.msra.mxu0 %v285
    %423 = vmatprep.subr.mxu0 0.0
    %424 = vmatpush1.msra.mxu0 %v286
    %425 = vmatprep.subr.mxu0 0.0
    %426 = vmatpush1.msra.mxu0 %v287
    %427 = vmatprep.subr.mxu0 0.0
    %428 = vmatpush1.msra.mxu0 %v288
    %429 = vmatprep.subr.mxu0 0.0
    %430 = vmatpush1.msra.mxu0 %v289
    %431 = vmatprep.mubr.f32.mxu0 %v225
    %432 = vmatmul.mubr.f32.gmra.mrb[0].mxu0 %v224
    %v433 = vpop.f32.mrb[0].mxu0
    %v434 = vadd.f32 %v364, %v433
    %v435 = vpop.f32.mrb[0].mxu0
    %436 = vdwg.mxu0
    %vm437 = vcmask 41984
    %v438 = vsel %vm437, %v434, 0.0
    %439 = vadd.xlane.f32.xlu0 %v438
    %v440 = vpop.xlane.xlu0 %439
    %v441 = vrcp.pop 6.0
    %v442 = vmul.f32 %v440, %v441
    %v443 = vsub.f32 %v434, %v442
    %445 = vset.pattern.permute.xlu0 6
    %446 = vperm.xlu0 %445, %v434
    %v447 = vpop.permute.xlu0 %446
    %v449 = vadd.f32 %v447, %v443
    %450 = vst.msk [vmem:[#allocation2] sm:$0x3] %vm437, %v449
    // Predicated region
    $region22: #{duel_noisy_dqn_forward.7} parent=1 // pred_check
      _
    $region23: #{duel_noisy_dqn_forward.7} parent=1 // pred_check_branch
      %452 = sbr.rel (0) target = $region25
    $region24: #{duel_noisy_dqn_forward.7} parent=1 // pred_region
      %s454 = ssub.s32 32, 32
      %455 = vsyncadd [#allocation3], %s454
      %s457 = sshll.u32 [#allocation2], 4
      %s458 = int_to_ptr.vmem [resolvable:$true] %s457
      %460 = dma.vmem_to_hbm [thread:$0]  %s458, 32, %s5, [#allocation3]
    $region25: #{duel_noisy_dqn_forward.7} parent=1 // pred_fallthru
      _
    // Predicated region
    $region26: #{duel_noisy_dqn_forward.7} parent=1 // pred_check
      _
    $region27: #{duel_noisy_dqn_forward.7} parent=1 // pred_check_branch
      %462 = sbr.rel (0) target = $region29
    $region28: #{duel_noisy_dqn_forward.7} parent=1 // pred_region
      %463 = dma.done [#allocation3], 32
    $region29: #{duel_noisy_dqn_forward.7} parent=1 // pred_fallthru
      _
    %464 = vsyncpa [#allocation3], 1

</llo_original>
